<compile_context>
chip_gen: v6e
topology: v6e:2x2x1
jax: 0.10.0
libtpu: 0.0.40
codegen_flags: <defaults>
</compile_context>

<pallas_src>
import functools

import jax
import jax.numpy as jnp
from jax.experimental import pallas as pl
from jax.experimental.pallas import tpu as pltpu


def _round_up(x, m):
    return (x + m - 1) // m * m


# ---------------------------------------------------------------------------
# Fused per-layer kernel: conv matmul (MXU) + BN batch stats + BN finalize +
# affine + ELU.  Grid = (phase, m_tile).
# ---------------------------------------------------------------------------
def _conv_bn_elu_kernel(inv_m, eps, p_ref, w_ref, gb_ref, o_ref,
                        sum_ref, ssq_ref, scale_ref, shift_ref):
    phase = pl.program_id(0)
    mi = pl.program_id(1)

    # Conv tile on the MXU: bf16 operands, f32 accumulation.  Recomputed in
    # phase 1 instead of round-tripping an f32 intermediate through HBM.
    y = jnp.dot(p_ref[...], w_ref[...], preferred_element_type=jnp.float32)

    @pl.when(jnp.logical_and(phase == 0, mi == 0))
    def _():
        sum_ref[...] = jnp.zeros_like(sum_ref)
        ssq_ref[...] = jnp.zeros_like(ssq_ref)

    @pl.when(phase == 0)
    def _():
        # Zero pad rows contribute nothing to the sums; the divide below uses
        # the true (unpadded) row count.
        sum_ref[...] += jnp.sum(y, axis=0, keepdims=True)
        ssq_ref[...] += jnp.sum(y * y, axis=0, keepdims=True)

    @pl.when(jnp.logical_and(phase == 1, mi == 0))
    def _():
        # BatchNorm2d training-mode statistics (biased variance), finalized
        # once in-kernel -- no XLA glue between the matmul and the BN apply.
        mean = sum_ref[...] * inv_m
        var = jnp.maximum(ssq_ref[...] * inv_m - mean * mean, 0.0)
        gamma = gb_ref[0:1, :]
        beta = gb_ref[1:2, :]
        scale = gamma * jax.lax.rsqrt(var + eps)
        scale_ref[...] = scale
        shift_ref[...] = beta - mean * scale

    @pl.when(phase == 1)
    def _():
        z = y * scale_ref[...] + shift_ref[...]
        # ELU (alpha = 1.0); min() keeps exp() out of the positive branch.
        o_ref[...] = jnp.where(
            z > 0, z, jnp.exp(jnp.minimum(z, 0.0)) - 1.0).astype(o_ref.dtype)


def _fused_conv_layer(patches, w_mat, gamma_beta, m_valid, tm, out_dtype,
                      *, eps=1e-5):
    mp, k = patches.shape
    c_out = w_mat.shape[1]
    n_mtiles = mp // tm

    kernel = functools.partial(_conv_bn_elu_kernel, 1.0 / m_valid, eps)
    return pl.pallas_call(
        kernel,
        out_shape=jax.ShapeDtypeStruct((mp, c_out), out_dtype),
        grid_spec=pltpu.PrefetchScalarGridSpec(
            num_scalar_prefetch=0,
            grid=(2, n_mtiles),                       # (phase, m tile)
            in_specs=[pl.BlockSpec((tm, k), lambda p, i: (i, 0)),
                      pl.BlockSpec((k, c_out), lambda p, i: (0, 0)),
                      pl.BlockSpec((2, c_out), lambda p, i: (0, 0))],
            # During phase 0 the output block index is pinned to 0 so no
            # garbage tiles are written back before phase 1 produces data.
            out_specs=pl.BlockSpec((tm, c_out), lambda p, i: (i * p, 0)),
            scratch_shapes=[pltpu.VMEM((1, c_out), jnp.float32),   # sum
                            pltpu.VMEM((1, c_out), jnp.float32),   # sumsq
                            pltpu.VMEM((1, c_out), jnp.float32),   # scale
                            pltpu.VMEM((1, c_out), jnp.float32)]), # shift
        compiler_params=pltpu.CompilerParams(
            # Stats accumulation ties the grid together -> both arbitrary.
            dimension_semantics=("arbitrary", "arbitrary"),
            # Tiles here are <1.5 MiB double-buffered: safely under the
            # 64 MiB v7x VMEM ceiling (and the 128 MiB v5e/v6e one).
            vmem_limit_bytes=32 * 1024 * 1024),
    )(patches, w_mat, gamma_beta)


# ---------------------------------------------------------------------------
# Plain-JAX glue: im2col patch extraction (NHWC internal layout).
# ---------------------------------------------------------------------------
def _im2col(x_nhwc, kh, kw, stride, pad):
    x = jnp.pad(x_nhwc, ((0, 0), (pad, pad), (pad, pad), (0, 0)))
    n, hp, wp, c = x.shape
    oh = (hp - kh) // stride + 1
    ow = (wp - kw) // stride + 1
    cols = []
    for i in range(kh):
        for j in range(kw):
            cols.append(x[:, i:i + stride * oh:stride, j:j + stride * ow:stride, :])
    p = jnp.stack(cols, axis=3)            # (N, OH, OW, KH*KW, C)
    return p.reshape(n * oh * ow, kh * kw * c), oh, ow


# ---------------------------------------------------------------------------
# One ConvBlock: Conv2d -> BatchNorm2d (training batch stats) -> ELU
# ---------------------------------------------------------------------------
def _conv_block(x_nhwc, w, gamma, beta, stride, pad, out_dtype,
                *, tile_m_max=1024, eps=1e-5):
    c_out, c_in, kh, kw = w.shape
    n = x_nhwc.shape[0]

    patches, oh, ow = _im2col(x_nhwc, kh, kw, stride, pad)
    m, k = patches.shape

    # Pick tm so that M padding is at most 15 rows (no near-empty dead tile).
    n_mtiles = -(-m // tile_m_max)
    tm = _round_up(-(-m // n_mtiles), 16)        # bf16 sublane packing align
    mp = tm * n_mtiles

    patches = jnp.pad(patches, ((0, mp - m), (0, 0))).astype(jnp.bfloat16)
    # (C_out, C_in, KH, KW) -> (KH, KW, C_in, C_out) -> (KH*KW*C_in, C_out)
    w_mat = jnp.transpose(w, (2, 3, 1, 0)).reshape(kh * kw * c_in, c_out)
    w_mat = w_mat.astype(jnp.bfloat16)
    gamma_beta = jnp.stack([gamma, beta], axis=0)          # (2, c_out) f32

    # NOTE: the conv bias is intentionally NOT applied -- training-mode
    # BatchNorm mean subtraction cancels a per-channel shift exactly.
    out = _fused_conv_layer(patches, w_mat, gamma_beta, m, tm, out_dtype,
                            eps=eps)
    return out[:m].reshape(n, oh, ow, c_out)


# ---------------------------------------------------------------------------
# Parameter init (deterministic, PyTorch-like uniform fan-in scaling)
# ---------------------------------------------------------------------------
def init_cnn_params(key, input_channels,
                    channels=(32, 64, 64),
                    kernel_sizes=(8, 4, 3)):
    params = []
    c_in = input_channels
    for c_out, k in zip(channels, kernel_sizes):
        key, kw_key, kb_key = jax.random.split(key, 3)
        fan_in = c_in * k * k
        bound = 1.0 / jnp.sqrt(fan_in)
        # PyTorch Conv2d weight layout: (C_out, C_in, KH, KW).
        w = jax.random.uniform(kw_key, (c_out, c_in, k, k), jnp.float32,
                               minval=-bound, maxval=bound)
        # Conv bias kept for state parity but unused: under training-mode
        # BatchNorm the forward pass is mathematically identical without it.
        b = jax.random.uniform(kb_key, (c_out,), jnp.float32,
                               minval=-bound, maxval=bound)
        gamma = jnp.ones((c_out,), jnp.float32)   # BatchNorm2d default init
        beta = jnp.zeros((c_out,), jnp.float32)
        params.append(dict(w=w, b=b, gamma=gamma, beta=beta))
        c_in = c_out
    return params


# ---------------------------------------------------------------------------
# Forward pass of Cnn (NCHW in, NCHW out; flatten_output=False by default)
# ---------------------------------------------------------------------------
@functools.partial(jax.jit,
                   static_argnames=("strides", "paddings", "flatten_output"))
def cnn_forward(params, x_nchw,
                strides=(4, 2, 1), paddings=(1, 1, 1), flatten_output=False):
    assert x_nchw.ndim in (3, 4)
    if x_nchw.ndim == 3:
        x_nchw = x_nchw[None]
    x = jnp.transpose(x_nchw, (0, 2, 3, 1))  # NCHW -> NHWC (internal layout)
    n_layers = len(params)
    for idx, (layer, stride, pad) in enumerate(zip(params, strides, paddings)):
        # Intermediate activations in bf16 (next layer's MXU operands are
        # bf16 anyway); keep the final layer's output in f32 for the caller.
        out_dtype = jnp.float32 if idx == n_layers - 1 else jnp.bfloat16
        x = _conv_block(x, layer["w"], layer["gamma"], layer["beta"],
                        stride, pad, out_dtype)
    out = jnp.transpose(x, (0, 3, 1, 2))     # NHWC -> NCHW
    if flatten_output:
        out = out.reshape(out.shape[0], -1)
    return out


if __name__ == "__main__":
    key = jax.random.PRNGKey(0)
    key, pkey, xkey = jax.random.split(key, 3)

    input_channels = 4
    params = init_cnn_params(pkey, input_channels)

    # Small input consistent with the conv stack (kernels 8/4/3, strides 4/2/1).
    x = jax.random.normal(xkey, (2, input_channels, 32, 32), jnp.float32)

    out = jax.block_until_ready(cnn_forward(params, x))
    # Expected: spatial chain 32 -> 7 -> 3 -> 3, 64 output channels.
    assert out.shape == (2, 64, 3, 3), out.shape
    assert bool(jnp.isfinite(out).all())
    print("KERNEL_OK")
</pallas_src>

<mosaic_0001>
module attributes {stable_mosaic.version = 11 : i64} {
  func.func @_conv_bn_elu_kernel(%arg0: i32, %arg1: i32, %arg2: memref<112x256xbf16, #tpu.memory_space<vmem>>, %arg3: memref<256x32xbf16, #tpu.memory_space<vmem>>, %arg4: memref<2x32xf32, #tpu.memory_space<vmem>>, %arg5: memref<112x32xbf16, #tpu.memory_space<vmem>>, %arg6: memref<1x32xf32, #tpu.memory_space<vmem>>, %arg7: memref<1x32xf32, #tpu.memory_space<vmem>>, %arg8: memref<1x32xf32, #tpu.memory_space<vmem>>, %arg9: memref<1x32xf32, #tpu.memory_space<vmem>>) attributes {dimension_semantics = [#tpu.dimension_semantics<arbitrary>, #tpu.dimension_semantics<arbitrary>], iteration_bounds = array<i64: 2, 1>, scalar_prefetch = 0 : i64, scratch_operands = 4 : i64, tpu.core_type = #tpu.core_type<tc>, window_params = [{transform_indices = @transform_0, window_bounds = array<i64: 112, 256>}, {pipeline_mode = #tpu.pipeline_mode<synchronous>, transform_indices = @transform_1, window_bounds = array<i64: 256, 32>}, {pipeline_mode = #tpu.pipeline_mode<synchronous>, transform_indices = @transform_2, window_bounds = array<i64: 2, 32>}, {transform_indices = @transform_3, window_bounds = array<i64: 112, 32>}]} {
    %c0 = arith.constant 0 : index
    %c0_0 = arith.constant 0 : index
    %0 = vector.load %arg2[%c0, %c0_0] : memref<112x256xbf16, #tpu.memory_space<vmem>>, vector<112x256xbf16>
    %c0_1 = arith.constant 0 : index
    %c0_2 = arith.constant 0 : index
    %1 = vector.load %arg3[%c0_1, %c0_2] : memref<256x32xbf16, #tpu.memory_space<vmem>>, vector<256x32xbf16>
    %cst = arith.constant dense<0.000000e+00> : vector<112x32xf32>
    %2 = tpu.matmul %0, %1, %cst {dimension_numbers = #tpu.dot_dimension_numbers<[1], [0], [0], [1], [0, 0, 1, 1], [], []>} : vector<112x256xbf16>, vector<256x32xbf16>, vector<112x32xf32> -> vector<112x32xf32>
    %c0_i32 = arith.constant 0 : i32
    %3 = arith.cmpi eq, %arg0, %c0_i32 : i32
    %c0_i32_3 = arith.constant 0 : i32
    %4 = arith.cmpi eq, %arg1, %c0_i32_3 : i32
    %5 = arith.andi %3, %4 : i1
    %6 = arith.extui %5 : i1 to i32
    %c0_i32_4 = arith.constant 0 : i32
    %7 = arith.cmpi ne, %6, %c0_i32_4 : i32
    scf.if %7 {
      %cst_11 = arith.constant 0.000000e+00 : f32
      %19 = vector.broadcast %cst_11 : f32 to vector<1x32xf32>
      %c0_12 = arith.constant 0 : index
      %c0_13 = arith.constant 0 : index
      %20 = vector.load %arg6[%c0_12, %c0_13] : memref<1x32xf32, #tpu.memory_space<vmem>>, vector<1x32xf32>
      tpu.vector_store %arg6[%c0_12, %c0_13], %19 {strides = array<i32>} : memref<1x32xf32, #tpu.memory_space<vmem>>, vector<1x32xf32>,
      %cst_14 = arith.constant 0.000000e+00 : f32
      %21 = vector.broadcast %cst_14 : f32 to vector<1x32xf32>
      %c0_15 = arith.constant 0 : index
      %c0_16 = arith.constant 0 : index
      %22 = vector.load %arg7[%c0_15, %c0_16] : memref<1x32xf32, #tpu.memory_space<vmem>>, vector<1x32xf32>
      tpu.vector_store %arg7[%c0_15, %c0_16], %21 {strides = array<i32>} : memref<1x32xf32, #tpu.memory_space<vmem>>, vector<1x32xf32>,
    } else {
    }
    %c0_i32_5 = arith.constant 0 : i32
    %8 = arith.cmpi eq, %arg0, %c0_i32_5 : i32
    %9 = arith.extui %8 : i1 to i32
    %c0_i32_6 = arith.constant 0 : i32
    %10 = arith.cmpi ne, %9, %c0_i32_6 : i32
    scf.if %10 {
      %c0_11 = arith.constant 0 : index
      %c0_12 = arith.constant 0 : index
      %19 = vector.load %arg6[%c0_11, %c0_12] : memref<1x32xf32, #tpu.memory_space<vmem>>, vector<1x32xf32>
      %cst_13 = arith.constant dense<0.000000e+00> : vector<32xf32>
      %20 = vector.multi_reduction <add>, %2, %cst_13 [0] : vector<112x32xf32> to vector<32xf32>
      %21 = vector.shape_cast %20 : vector<32xf32> to vector<1x32xf32>
      %22 = arith.addf %19, %21 : vector<1x32xf32>
      %c0_14 = arith.constant 0 : index
      %c0_15 = arith.constant 0 : index
      %23 = vector.load %arg6[%c0_14, %c0_15] : memref<1x32xf32, #tpu.memory_space<vmem>>, vector<1x32xf32>
      tpu.vector_store %arg6[%c0_14, %c0_15], %22 {strides = array<i32>} : memref<1x32xf32, #tpu.memory_space<vmem>>, vector<1x32xf32>,
      %c0_16 = arith.constant 0 : index
      %c0_17 = arith.constant 0 : index
      %24 = vector.load %arg7[%c0_16, %c0_17] : memref<1x32xf32, #tpu.memory_space<vmem>>, vector<1x32xf32>
      %25 = arith.mulf %2, %2 : vector<112x32xf32>
      %cst_18 = arith.constant dense<0.000000e+00> : vector<32xf32>
      %26 = vector.multi_reduction <add>, %25, %cst_18 [0] : vector<112x32xf32> to vector<32xf32>
      %27 = vector.shape_cast %26 : vector<32xf32> to vector<1x32xf32>
      %28 = arith.addf %24, %27 : vector<1x32xf32>
      %c0_19 = arith.constant 0 : index
      %c0_20 = arith.constant 0 : index
      %29 = vector.load %arg7[%c0_19, %c0_20] : memref<1x32xf32, #tpu.memory_space<vmem>>, vector<1x32xf32>
      tpu.vector_store %arg7[%c0_19, %c0_20], %28 {strides = array<i32>} : memref<1x32xf32, #tpu.memory_space<vmem>>, vector<1x32xf32>,
    } else {
    }
    %c1_i32 = arith.constant 1 : i32
    %11 = arith.cmpi eq, %arg0, %c1_i32 : i32
    %c0_i32_7 = arith.constant 0 : i32
    %12 = arith.cmpi eq, %arg1, %c0_i32_7 : i32
    %13 = arith.andi %11, %12 : i1
    %14 = arith.extui %13 : i1 to i32
    %c0_i32_8 = arith.constant 0 : i32
    %15 = arith.cmpi ne, %14, %c0_i32_8 : i32
    scf.if %15 {
      %c0_11 = arith.constant 0 : index
      %c0_12 = arith.constant 0 : index
      %19 = vector.load %arg6[%c0_11, %c0_12] : memref<1x32xf32, #tpu.memory_space<vmem>>, vector<1x32xf32>
      %cst_13 = arith.constant 0.0102040814 : f32
      %20 = vector.broadcast %cst_13 : f32 to vector<1x32xf32>
      %21 = arith.mulf %19, %20 : vector<1x32xf32>
      %c0_14 = arith.constant 0 : index
      %c0_15 = arith.constant 0 : index
      %22 = vector.load %arg7[%c0_14, %c0_15] : memref<1x32xf32, #tpu.memory_space<vmem>>, vector<1x32xf32>
      %cst_16 = arith.constant 0.0102040814 : f32
      %23 = vector.broadcast %cst_16 : f32 to vector<1x32xf32>
      %24 = arith.mulf %22, %23 : vector<1x32xf32>
      %25 = arith.mulf %21, %21 : vector<1x32xf32>
      %26 = arith.subf %24, %25 : vector<1x32xf32>
      %cst_17 = arith.constant 0.000000e+00 : f32
      %27 = vector.broadcast %cst_17 : f32 to vector<1x32xf32>
      %28 = arith.maximumf %26, %27 : vector<1x32xf32>
      %c0_18 = arith.constant 0 : index
      %c0_19 = arith.constant 0 : index
      %29 = vector.load %arg4[%c0_18, %c0_19] : memref<2x32xf32, #tpu.memory_space<vmem>>, vector<1x32xf32>
      %c1 = arith.constant 1 : index
      %c0_20 = arith.constant 0 : index
      %30 = vector.load %arg4[%c1, %c0_20] : memref<2x32xf32, #tpu.memory_space<vmem>>, vector<1x32xf32>
      %cst_21 = arith.constant 9.99999974E-6 : f32
      %31 = vector.broadcast %cst_21 : f32 to vector<1x32xf32>
      %32 = arith.addf %28, %31 : vector<1x32xf32>
      %33 = math.rsqrt %32 : vector<1x32xf32>
      %34 = arith.mulf %29, %33 : vector<1x32xf32>
      %c0_22 = arith.constant 0 : index
      %c0_23 = arith.constant 0 : index
      %35 = vector.load %arg8[%c0_22, %c0_23] : memref<1x32xf32, #tpu.memory_space<vmem>>, vector<1x32xf32>
      tpu.vector_store %arg8[%c0_22, %c0_23], %34 {strides = array<i32>} : memref<1x32xf32, #tpu.memory_space<vmem>>, vector<1x32xf32>,
      %36 = arith.mulf %21, %34 : vector<1x32xf32>
      %37 = arith.subf %30, %36 : vector<1x32xf32>
      %c0_24 = arith.constant 0 : index
      %c0_25 = arith.constant 0 : index
      %38 = vector.load %arg9[%c0_24, %c0_25] : memref<1x32xf32, #tpu.memory_space<vmem>>, vector<1x32xf32>
      tpu.vector_store %arg9[%c0_24, %c0_25], %37 {strides = array<i32>} : memref<1x32xf32, #tpu.memory_space<vmem>>, vector<1x32xf32>,
    } else {
    }
    %c1_i32_9 = arith.constant 1 : i32
    %16 = arith.cmpi eq, %arg0, %c1_i32_9 : i32
    %17 = arith.extui %16 : i1 to i32
    %c0_i32_10 = arith.constant 0 : i32
    %18 = arith.cmpi ne, %17, %c0_i32_10 : i32
    scf.if %18 {
      %c0_11 = arith.constant 0 : index
      %c0_12 = arith.constant 0 : index
      %19 = vector.load %arg8[%c0_11, %c0_12] : memref<1x32xf32, #tpu.memory_space<vmem>>, vector<1x32xf32>
      %20 = vector.broadcast %19 : vector<1x32xf32> to vector<112x32xf32>
      %21 = arith.mulf %2, %20 : vector<112x32xf32>
      %c0_13 = arith.constant 0 : index
      %c0_14 = arith.constant 0 : index
      %22 = vector.load %arg9[%c0_13, %c0_14] : memref<1x32xf32, #tpu.memory_space<vmem>>, vector<1x32xf32>
      %23 = vector.broadcast %22 : vector<1x32xf32> to vector<112x32xf32>
      %24 = arith.addf %21, %23 : vector<112x32xf32>
      %cst_15 = arith.constant 0.000000e+00 : f32
      %25 = vector.broadcast %cst_15 : f32 to vector<112x32xf32>
      %26 = arith.cmpf ogt, %24, %25 : vector<112x32xf32>
      %cst_16 = arith.constant 0.000000e+00 : f32
      %27 = vector.broadcast %cst_16 : f32 to vector<112x32xf32>
      %28 = arith.minimumf %24, %27 : vector<112x32xf32>
      %29 = math.exp %28 : vector<112x32xf32>
      %cst_17 = arith.constant 1.000000e+00 : f32
      %30 = vector.broadcast %cst_17 : f32 to vector<112x32xf32>
      %31 = arith.subf %29, %30 : vector<112x32xf32>
      %32 = arith.select %26, %24, %31 : vector<112x32xi1>, vector<112x32xf32>
      %33 = arith.truncf %32 : vector<112x32xf32> to vector<112x32xbf16>
      %c0_18 = arith.constant 0 : index
      %c0_19 = arith.constant 0 : index
      %34 = vector.load %arg5[%c0_18, %c0_19] : memref<112x32xbf16, #tpu.memory_space<vmem>>, vector<112x32xbf16>
      tpu.vector_store %arg5[%c0_18, %c0_19], %33 {strides = array<i32>} : memref<112x32xbf16, #tpu.memory_space<vmem>>, vector<112x32xbf16>,
    } else {
    }
    return
  }
  func.func @transform_0(%arg0: i32, %arg1: i32) -> (i32, i32) {
    %c0_i32 = arith.constant 0 : i32
    %c0_i32_0 = arith.constant 0 : i32
    return %arg1, %c0_i32 : i32, i32
  }
  func.func @transform_1(%arg0: i32, %arg1: i32) -> (i32, i32) {
    %c0_i32 = arith.constant 0 : i32
    %c0_i32_0 = arith.constant 0 : i32
    %c0_i32_1 = arith.constant 0 : i32
    return %c0_i32, %c0_i32_0 : i32, i32
  }
  func.func @transform_2(%arg0: i32, %arg1: i32) -> (i32, i32) {
    %c0_i32 = arith.constant 0 : i32
    %c0_i32_0 = arith.constant 0 : i32
    %c0_i32_1 = arith.constant 0 : i32
    return %c0_i32, %c0_i32_0 : i32, i32
  }
  func.func @transform_3(%arg0: i32, %arg1: i32) -> (i32, i32) {
    %0 = arith.muli %arg1, %arg0 : i32
    %c0_i32 = arith.constant 0 : i32
    %c0_i32_0 = arith.constant 0 : i32
    return %0, %c0_i32 : i32, i32
  }
}

module attributes {stable_mosaic.version = 11 : i64} {
  func.func @_conv_bn_elu_kernel(%arg0: i32, %arg1: i32, %arg2: memref<32x512xbf16, #tpu.memory_space<vmem>>, %arg3: memref<512x64xbf16, #tpu.memory_space<vmem>>, %arg4: memref<2x64xf32, #tpu.memory_space<vmem>>, %arg5: memref<32x64xbf16, #tpu.memory_space<vmem>>, %arg6: memref<1x64xf32, #tpu.memory_space<vmem>>, %arg7: memref<1x64xf32, #tpu.memory_space<vmem>>, %arg8: memref<1x64xf32, #tpu.memory_space<vmem>>, %arg9: memref<1x64xf32, #tpu.memory_space<vmem>>) attributes {dimension_semantics = [#tpu.dimension_semantics<arbitrary>, #tpu.dimension_semantics<arbitrary>], iteration_bounds = array<i64: 2, 1>, scalar_prefetch = 0 : i64, scratch_operands = 4 : i64, tpu.core_type = #tpu.core_type<tc>, window_params = [{transform_indices = @transform_0, window_bounds = array<i64: 32, 512>}, {pipeline_mode = #tpu.pipeline_mode<synchronous>, transform_indices = @transform_1, window_bounds = array<i64: 512, 64>}, {pipeline_mode = #tpu.pipeline_mode<synchronous>, transform_indices = @transform_2, window_bounds = array<i64: 2, 64>}, {transform_indices = @transform_3, window_bounds = array<i64: 32, 64>}]} {
    %c0 = arith.constant 0 : index
    %c0_0 = arith.constant 0 : index
    %0 = vector.load %arg2[%c0, %c0_0] : memref<32x512xbf16, #tpu.memory_space<vmem>>, vector<32x512xbf16>
    %c0_1 = arith.constant 0 : index
    %c0_2 = arith.constant 0 : index
    %1 = vector.load %arg3[%c0_1, %c0_2] : memref<512x64xbf16, #tpu.memory_space<vmem>>, vector<512x64xbf16>
    %cst = arith.constant dense<0.000000e+00> : vector<32x64xf32>
    %2 = tpu.matmul %0, %1, %cst {dimension_numbers = #tpu.dot_dimension_numbers<[1], [0], [0], [1], [0, 0, 1, 1], [], []>} : vector<32x512xbf16>, vector<512x64xbf16>, vector<32x64xf32> -> vector<32x64xf32>
    %c0_i32 = arith.constant 0 : i32
    %3 = arith.cmpi eq, %arg0, %c0_i32 : i32
    %c0_i32_3 = arith.constant 0 : i32
    %4 = arith.cmpi eq, %arg1, %c0_i32_3 : i32
    %5 = arith.andi %3, %4 : i1
    %6 = arith.extui %5 : i1 to i32
    %c0_i32_4 = arith.constant 0 : i32
    %7 = arith.cmpi ne, %6, %c0_i32_4 : i32
    scf.if %7 {
      %cst_11 = arith.constant 0.000000e+00 : f32
      %19 = vector.broadcast %cst_11 : f32 to vector<1x64xf32>
      %c0_12 = arith.constant 0 : index
      %c0_13 = arith.constant 0 : index
      %20 = vector.load %arg6[%c0_12, %c0_13] : memref<1x64xf32, #tpu.memory_space<vmem>>, vector<1x64xf32>
      tpu.vector_store %arg6[%c0_12, %c0_13], %19 {strides = array<i32>} : memref<1x64xf32, #tpu.memory_space<vmem>>, vector<1x64xf32>,
      %cst_14 = arith.constant 0.000000e+00 : f32
      %21 = vector.broadcast %cst_14 : f32 to vector<1x64xf32>
      %c0_15 = arith.constant 0 : index
      %c0_16 = arith.constant 0 : index
      %22 = vector.load %arg7[%c0_15, %c0_16] : memref<1x64xf32, #tpu.memory_space<vmem>>, vector<1x64xf32>
      tpu.vector_store %arg7[%c0_15, %c0_16], %21 {strides = array<i32>} : memref<1x64xf32, #tpu.memory_space<vmem>>, vector<1x64xf32>,
    } else {
    }
    %c0_i32_5 = arith.constant 0 : i32
    %8 = arith.cmpi eq, %arg0, %c0_i32_5 : i32
    %9 = arith.extui %8 : i1 to i32
    %c0_i32_6 = arith.constant 0 : i32
    %10 = arith.cmpi ne, %9, %c0_i32_6 : i32
    scf.if %10 {
      %c0_11 = arith.constant 0 : index
      %c0_12 = arith.constant 0 : index
      %19 = vector.load %arg6[%c0_11, %c0_12] : memref<1x64xf32, #tpu.memory_space<vmem>>, vector<1x64xf32>
      %cst_13 = arith.constant dense<0.000000e+00> : vector<64xf32>
      %20 = vector.multi_reduction <add>, %2, %cst_13 [0] : vector<32x64xf32> to vector<64xf32>
      %21 = vector.shape_cast %20 : vector<64xf32> to vector<1x64xf32>
      %22 = arith.addf %19, %21 : vector<1x64xf32>
      %c0_14 = arith.constant 0 : index
      %c0_15 = arith.constant 0 : index
      %23 = vector.load %arg6[%c0_14, %c0_15] : memref<1x64xf32, #tpu.memory_space<vmem>>, vector<1x64xf32>
      tpu.vector_store %arg6[%c0_14, %c0_15], %22 {strides = array<i32>} : memref<1x64xf32, #tpu.memory_space<vmem>>, vector<1x64xf32>,
      %c0_16 = arith.constant 0 : index
      %c0_17 = arith.constant 0 : index
      %24 = vector.load %arg7[%c0_16, %c0_17] : memref<1x64xf32, #tpu.memory_space<vmem>>, vector<1x64xf32>
      %25 = arith.mulf %2, %2 : vector<32x64xf32>
      %cst_18 = arith.constant dense<0.000000e+00> : vector<64xf32>
      %26 = vector.multi_reduction <add>, %25, %cst_18 [0] : vector<32x64xf32> to vector<64xf32>
      %27 = vector.shape_cast %26 : vector<64xf32> to vector<1x64xf32>
      %28 = arith.addf %24, %27 : vector<1x64xf32>
      %c0_19 = arith.constant 0 : index
      %c0_20 = arith.constant 0 : index
      %29 = vector.load %arg7[%c0_19, %c0_20] : memref<1x64xf32, #tpu.memory_space<vmem>>, vector<1x64xf32>
      tpu.vector_store %arg7[%c0_19, %c0_20], %28 {strides = array<i32>} : memref<1x64xf32, #tpu.memory_space<vmem>>, vector<1x64xf32>,
    } else {
    }
    %c1_i32 = arith.constant 1 : i32
    %11 = arith.cmpi eq, %arg0, %c1_i32 : i32
    %c0_i32_7 = arith.constant 0 : i32
    %12 = arith.cmpi eq, %arg1, %c0_i32_7 : i32
    %13 = arith.andi %11, %12 : i1
    %14 = arith.extui %13 : i1 to i32
    %c0_i32_8 = arith.constant 0 : i32
    %15 = arith.cmpi ne, %14, %c0_i32_8 : i32
    scf.if %15 {
      %c0_11 = arith.constant 0 : index
      %c0_12 = arith.constant 0 : index
      %19 = vector.load %arg6[%c0_11, %c0_12] : memref<1x64xf32, #tpu.memory_space<vmem>>, vector<1x64xf32>
      %cst_13 = arith.constant 0.055555556 : f32
      %20 = vector.broadcast %cst_13 : f32 to vector<1x64xf32>
      %21 = arith.mulf %19, %20 : vector<1x64xf32>
      %c0_14 = arith.constant 0 : index
      %c0_15 = arith.constant 0 : index
      %22 = vector.load %arg7[%c0_14, %c0_15] : memref<1x64xf32, #tpu.memory_space<vmem>>, vector<1x64xf32>
      %cst_16 = arith.constant 0.055555556 : f32
      %23 = vector.broadcast %cst_16 : f32 to vector<1x64xf32>
      %24 = arith.mulf %22, %23 : vector<1x64xf32>
      %25 = arith.mulf %21, %21 : vector<1x64xf32>
      %26 = arith.subf %24, %25 : vector<1x64xf32>
      %cst_17 = arith.constant 0.000000e+00 : f32
      %27 = vector.broadcast %cst_17 : f32 to vector<1x64xf32>
      %28 = arith.maximumf %26, %27 : vector<1x64xf32>
      %c0_18 = arith.constant 0 : index
      %c0_19 = arith.constant 0 : index
      %29 = vector.load %arg4[%c0_18, %c0_19] : memref<2x64xf32, #tpu.memory_space<vmem>>, vector<1x64xf32>
      %c1 = arith.constant 1 : index
      %c0_20 = arith.constant 0 : index
      %30 = vector.load %arg4[%c1, %c0_20] : memref<2x64xf32, #tpu.memory_space<vmem>>, vector<1x64xf32>
      %cst_21 = arith.constant 9.99999974E-6 : f32
      %31 = vector.broadcast %cst_21 : f32 to vector<1x64xf32>
      %32 = arith.addf %28, %31 : vector<1x64xf32>
      %33 = math.rsqrt %32 : vector<1x64xf32>
      %34 = arith.mulf %29, %33 : vector<1x64xf32>
      %c0_22 = arith.constant 0 : index
      %c0_23 = arith.constant 0 : index
      %35 = vector.load %arg8[%c0_22, %c0_23] : memref<1x64xf32, #tpu.memory_space<vmem>>, vector<1x64xf32>
      tpu.vector_store %arg8[%c0_22, %c0_23], %34 {strides = array<i32>} : memref<1x64xf32, #tpu.memory_space<vmem>>, vector<1x64xf32>,
      %36 = arith.mulf %21, %34 : vector<1x64xf32>
      %37 = arith.subf %30, %36 : vector<1x64xf32>
      %c0_24 = arith.constant 0 : index
      %c0_25 = arith.constant 0 : index
      %38 = vector.load %arg9[%c0_24, %c0_25] : memref<1x64xf32, #tpu.memory_space<vmem>>, vector<1x64xf32>
      tpu.vector_store %arg9[%c0_24, %c0_25], %37 {strides = array<i32>} : memref<1x64xf32, #tpu.memory_space<vmem>>, vector<1x64xf32>,
    } else {
    }
    %c1_i32_9 = arith.constant 1 : i32
    %16 = arith.cmpi eq, %arg0, %c1_i32_9 : i32
    %17 = arith.extui %16 : i1 to i32
    %c0_i32_10 = arith.constant 0 : i32
    %18 = arith.cmpi ne, %17, %c0_i32_10 : i32
    scf.if %18 {
      %c0_11 = arith.constant 0 : index
      %c0_12 = arith.constant 0 : index
      %19 = vector.load %arg8[%c0_11, %c0_12] : memref<1x64xf32, #tpu.memory_space<vmem>>, vector<1x64xf32>
      %20 = vector.broadcast %19 : vector<1x64xf32> to vector<32x64xf32>
      %21 = arith.mulf %2, %20 : vector<32x64xf32>
      %c0_13 = arith.constant 0 : index
      %c0_14 = arith.constant 0 : index
      %22 = vector.load %arg9[%c0_13, %c0_14] : memref<1x64xf32, #tpu.memory_space<vmem>>, vector<1x64xf32>
      %23 = vector.broadcast %22 : vector<1x64xf32> to vector<32x64xf32>
      %24 = arith.addf %21, %23 : vector<32x64xf32>
      %cst_15 = arith.constant 0.000000e+00 : f32
      %25 = vector.broadcast %cst_15 : f32 to vector<32x64xf32>
      %26 = arith.cmpf ogt, %24, %25 : vector<32x64xf32>
      %cst_16 = arith.constant 0.000000e+00 : f32
      %27 = vector.broadcast %cst_16 : f32 to vector<32x64xf32>
      %28 = arith.minimumf %24, %27 : vector<32x64xf32>
      %29 = math.exp %28 : vector<32x64xf32>
      %cst_17 = arith.constant 1.000000e+00 : f32
      %30 = vector.broadcast %cst_17 : f32 to vector<32x64xf32>
      %31 = arith.subf %29, %30 : vector<32x64xf32>
      %32 = arith.select %26, %24, %31 : vector<32x64xi1>, vector<32x64xf32>
      %33 = arith.truncf %32 : vector<32x64xf32> to vector<32x64xbf16>
      %c0_18 = arith.constant 0 : index
      %c0_19 = arith.constant 0 : index
      %34 = vector.load %arg5[%c0_18, %c0_19] : memref<32x64xbf16, #tpu.memory_space<vmem>>, vector<32x64xbf16>
      tpu.vector_store %arg5[%c0_18, %c0_19], %33 {strides = array<i32>} : memref<32x64xbf16, #tpu.memory_space<vmem>>, vector<32x64xbf16>,
    } else {
    }
    return
  }
  func.func @transform_0(%arg0: i32, %arg1: i32) -> (i32, i32) {
    %c0_i32 = arith.constant 0 : i32
    %c0_i32_0 = arith.constant 0 : i32
    return %arg1, %c0_i32 : i32, i32
  }
  func.func @transform_1(%arg0: i32, %arg1: i32) -> (i32, i32) {
    %c0_i32 = arith.constant 0 : i32
    %c0_i32_0 = arith.constant 0 : i32
    %c0_i32_1 = arith.constant 0 : i32
    return %c0_i32, %c0_i32_0 : i32, i32
  }
  func.func @transform_2(%arg0: i32, %arg1: i32) -> (i32, i32) {
    %c0_i32 = arith.constant 0 : i32
    %c0_i32_0 = arith.constant 0 : i32
    %c0_i32_1 = arith.constant 0 : i32
    return %c0_i32, %c0_i32_0 : i32, i32
  }
  func.func @transform_3(%arg0: i32, %arg1: i32) -> (i32, i32) {
    %0 = arith.muli %arg1, %arg0 : i32
    %c0_i32 = arith.constant 0 : i32
    %c0_i32_0 = arith.constant 0 : i32
    return %0, %c0_i32 : i32, i32
  }
}

module attributes {stable_mosaic.version = 11 : i64} {
  func.func @_conv_bn_elu_kernel(%arg0: i32, %arg1: i32, %arg2: memref<32x576xbf16, #tpu.memory_space<vmem>>, %arg3: memref<576x64xbf16, #tpu.memory_space<vmem>>, %arg4: memref<2x64xf32, #tpu.memory_space<vmem>>, %arg5: memref<32x64xf32, #tpu.memory_space<vmem>>, %arg6: memref<1x64xf32, #tpu.memory_space<vmem>>, %arg7: memref<1x64xf32, #tpu.memory_space<vmem>>, %arg8: memref<1x64xf32, #tpu.memory_space<vmem>>, %arg9: memref<1x64xf32, #tpu.memory_space<vmem>>) attributes {dimension_semantics = [#tpu.dimension_semantics<arbitrary>, #tpu.dimension_semantics<arbitrary>], iteration_bounds = array<i64: 2, 1>, scalar_prefetch = 0 : i64, scratch_operands = 4 : i64, tpu.core_type = #tpu.core_type<tc>, window_params = [{transform_indices = @transform_0, window_bounds = array<i64: 32, 576>}, {pipeline_mode = #tpu.pipeline_mode<synchronous>, transform_indices = @transform_1, window_bounds = array<i64: 576, 64>}, {pipeline_mode = #tpu.pipeline_mode<synchronous>, transform_indices = @transform_2, window_bounds = array<i64: 2, 64>}, {transform_indices = @transform_3, window_bounds = array<i64: 32, 64>}]} {
    %c0 = arith.constant 0 : index
    %c0_0 = arith.constant 0 : index
    %0 = vector.load %arg2[%c0, %c0_0] : memref<32x576xbf16, #tpu.memory_space<vmem>>, vector<32x576xbf16>
    %c0_1 = arith.constant 0 : index
    %c0_2 = arith.constant 0 : index
    %1 = vector.load %arg3[%c0_1, %c0_2] : memref<576x64xbf16, #tpu.memory_space<vmem>>, vector<576x64xbf16>
    %cst = arith.constant dense<0.000000e+00> : vector<32x64xf32>
    %2 = tpu.matmul %0, %1, %cst {dimension_numbers = #tpu.dot_dimension_numbers<[1], [0], [0], [1], [0, 0, 1, 1], [], []>} : vector<32x576xbf16>, vector<576x64xbf16>, vector<32x64xf32> -> vector<32x64xf32>
    %c0_i32 = arith.constant 0 : i32
    %3 = arith.cmpi eq, %arg0, %c0_i32 : i32
    %c0_i32_3 = arith.constant 0 : i32
    %4 = arith.cmpi eq, %arg1, %c0_i32_3 : i32
    %5 = arith.andi %3, %4 : i1
    %6 = arith.extui %5 : i1 to i32
    %c0_i32_4 = arith.constant 0 : i32
    %7 = arith.cmpi ne, %6, %c0_i32_4 : i32
    scf.if %7 {
      %cst_11 = arith.constant 0.000000e+00 : f32
      %19 = vector.broadcast %cst_11 : f32 to vector<1x64xf32>
      %c0_12 = arith.constant 0 : index
      %c0_13 = arith.constant 0 : index
      %20 = vector.load %arg6[%c0_12, %c0_13] : memref<1x64xf32, #tpu.memory_space<vmem>>, vector<1x64xf32>
      tpu.vector_store %arg6[%c0_12, %c0_13], %19 {strides = array<i32>} : memref<1x64xf32, #tpu.memory_space<vmem>>, vector<1x64xf32>,
      %cst_14 = arith.constant 0.000000e+00 : f32
      %21 = vector.broadcast %cst_14 : f32 to vector<1x64xf32>
      %c0_15 = arith.constant 0 : index
      %c0_16 = arith.constant 0 : index
      %22 = vector.load %arg7[%c0_15, %c0_16] : memref<1x64xf32, #tpu.memory_space<vmem>>, vector<1x64xf32>
      tpu.vector_store %arg7[%c0_15, %c0_16], %21 {strides = array<i32>} : memref<1x64xf32, #tpu.memory_space<vmem>>, vector<1x64xf32>,
    } else {
    }
    %c0_i32_5 = arith.constant 0 : i32
    %8 = arith.cmpi eq, %arg0, %c0_i32_5 : i32
    %9 = arith.extui %8 : i1 to i32
    %c0_i32_6 = arith.constant 0 : i32
    %10 = arith.cmpi ne, %9, %c0_i32_6 : i32
    scf.if %10 {
      %c0_11 = arith.constant 0 : index
      %c0_12 = arith.constant 0 : index
      %19 = vector.load %arg6[%c0_11, %c0_12] : memref<1x64xf32, #tpu.memory_space<vmem>>, vector<1x64xf32>
      %cst_13 = arith.constant dense<0.000000e+00> : vector<64xf32>
      %20 = vector.multi_reduction <add>, %2, %cst_13 [0] : vector<32x64xf32> to vector<64xf32>
      %21 = vector.shape_cast %20 : vector<64xf32> to vector<1x64xf32>
      %22 = arith.addf %19, %21 : vector<1x64xf32>
      %c0_14 = arith.constant 0 : index
      %c0_15 = arith.constant 0 : index
      %23 = vector.load %arg6[%c0_14, %c0_15] : memref<1x64xf32, #tpu.memory_space<vmem>>, vector<1x64xf32>
      tpu.vector_store %arg6[%c0_14, %c0_15], %22 {strides = array<i32>} : memref<1x64xf32, #tpu.memory_space<vmem>>, vector<1x64xf32>,
      %c0_16 = arith.constant 0 : index
      %c0_17 = arith.constant 0 : index
      %24 = vector.load %arg7[%c0_16, %c0_17] : memref<1x64xf32, #tpu.memory_space<vmem>>, vector<1x64xf32>
      %25 = arith.mulf %2, %2 : vector<32x64xf32>
      %cst_18 = arith.constant dense<0.000000e+00> : vector<64xf32>
      %26 = vector.multi_reduction <add>, %25, %cst_18 [0] : vector<32x64xf32> to vector<64xf32>
      %27 = vector.shape_cast %26 : vector<64xf32> to vector<1x64xf32>
      %28 = arith.addf %24, %27 : vector<1x64xf32>
      %c0_19 = arith.constant 0 : index
      %c0_20 = arith.constant 0 : index
      %29 = vector.load %arg7[%c0_19, %c0_20] : memref<1x64xf32, #tpu.memory_space<vmem>>, vector<1x64xf32>
      tpu.vector_store %arg7[%c0_19, %c0_20], %28 {strides = array<i32>} : memref<1x64xf32, #tpu.memory_space<vmem>>, vector<1x64xf32>,
    } else {
    }
    %c1_i32 = arith.constant 1 : i32
    %11 = arith.cmpi eq, %arg0, %c1_i32 : i32
    %c0_i32_7 = arith.constant 0 : i32
    %12 = arith.cmpi eq, %arg1, %c0_i32_7 : i32
    %13 = arith.andi %11, %12 : i1
    %14 = arith.extui %13 : i1 to i32
    %c0_i32_8 = arith.constant 0 : i32
    %15 = arith.cmpi ne, %14, %c0_i32_8 : i32
    scf.if %15 {
      %c0_11 = arith.constant 0 : index
      %c0_12 = arith.constant 0 : index
      %19 = vector.load %arg6[%c0_11, %c0_12] : memref<1x64xf32, #tpu.memory_space<vmem>>, vector<1x64xf32>
      %cst_13 = arith.constant 0.055555556 : f32
      %20 = vector.broadcast %cst_13 : f32 to vector<1x64xf32>
      %21 = arith.mulf %19, %20 : vector<1x64xf32>
      %c0_14 = arith.constant 0 : index
      %c0_15 = arith.constant 0 : index
      %22 = vector.load %arg7[%c0_14, %c0_15] : memref<1x64xf32, #tpu.memory_space<vmem>>, vector<1x64xf32>
      %cst_16 = arith.constant 0.055555556 : f32
      %23 = vector.broadcast %cst_16 : f32 to vector<1x64xf32>
      %24 = arith.mulf %22, %23 : vector<1x64xf32>
      %25 = arith.mulf %21, %21 : vector<1x64xf32>
      %26 = arith.subf %24, %25 : vector<1x64xf32>
      %cst_17 = arith.constant 0.000000e+00 : f32
      %27 = vector.broadcast %cst_17 : f32 to vector<1x64xf32>
      %28 = arith.maximumf %26, %27 : vector<1x64xf32>
      %c0_18 = arith.constant 0 : index
      %c0_19 = arith.constant 0 : index
      %29 = vector.load %arg4[%c0_18, %c0_19] : memref<2x64xf32, #tpu.memory_space<vmem>>, vector<1x64xf32>
      %c1 = arith.constant 1 : index
      %c0_20 = arith.constant 0 : index
      %30 = vector.load %arg4[%c1, %c0_20] : memref<2x64xf32, #tpu.memory_space<vmem>>, vector<1x64xf32>
      %cst_21 = arith.constant 9.99999974E-6 : f32
      %31 = vector.broadcast %cst_21 : f32 to vector<1x64xf32>
      %32 = arith.addf %28, %31 : vector<1x64xf32>
      %33 = math.rsqrt %32 : vector<1x64xf32>
      %34 = arith.mulf %29, %33 : vector<1x64xf32>
      %c0_22 = arith.constant 0 : index
      %c0_23 = arith.constant 0 : index
      %35 = vector.load %arg8[%c0_22, %c0_23] : memref<1x64xf32, #tpu.memory_space<vmem>>, vector<1x64xf32>
      tpu.vector_store %arg8[%c0_22, %c0_23], %34 {strides = array<i32>} : memref<1x64xf32, #tpu.memory_space<vmem>>, vector<1x64xf32>,
      %36 = arith.mulf %21, %34 : vector<1x64xf32>
      %37 = arith.subf %30, %36 : vector<1x64xf32>
      %c0_24 = arith.constant 0 : index
      %c0_25 = arith.constant 0 : index
      %38 = vector.load %arg9[%c0_24, %c0_25] : memref<1x64xf32, #tpu.memory_space<vmem>>, vector<1x64xf32>
      tpu.vector_store %arg9[%c0_24, %c0_25], %37 {strides = array<i32>} : memref<1x64xf32, #tpu.memory_space<vmem>>, vector<1x64xf32>,
    } else {
    }
    %c1_i32_9 = arith.constant 1 : i32
    %16 = arith.cmpi eq, %arg0, %c1_i32_9 : i32
    %17 = arith.extui %16 : i1 to i32
    %c0_i32_10 = arith.constant 0 : i32
    %18 = arith.cmpi ne, %17, %c0_i32_10 : i32
    scf.if %18 {
      %c0_11 = arith.constant 0 : index
      %c0_12 = arith.constant 0 : index
      %19 = vector.load %arg8[%c0_11, %c0_12] : memref<1x64xf32, #tpu.memory_space<vmem>>, vector<1x64xf32>
      %20 = vector.broadcast %19 : vector<1x64xf32> to vector<32x64xf32>
      %21 = arith.mulf %2, %20 : vector<32x64xf32>
      %c0_13 = arith.constant 0 : index
      %c0_14 = arith.constant 0 : index
      %22 = vector.load %arg9[%c0_13, %c0_14] : memref<1x64xf32, #tpu.memory_space<vmem>>, vector<1x64xf32>
      %23 = vector.broadcast %22 : vector<1x64xf32> to vector<32x64xf32>
      %24 = arith.addf %21, %23 : vector<32x64xf32>
      %cst_15 = arith.constant 0.000000e+00 : f32
      %25 = vector.broadcast %cst_15 : f32 to vector<32x64xf32>
      %26 = arith.cmpf ogt, %24, %25 : vector<32x64xf32>
      %cst_16 = arith.constant 0.000000e+00 : f32
      %27 = vector.broadcast %cst_16 : f32 to vector<32x64xf32>
      %28 = arith.minimumf %24, %27 : vector<32x64xf32>
      %29 = math.exp %28 : vector<32x64xf32>
      %cst_17 = arith.constant 1.000000e+00 : f32
      %30 = vector.broadcast %cst_17 : f32 to vector<32x64xf32>
      %31 = arith.subf %29, %30 : vector<32x64xf32>
      %32 = arith.select %26, %24, %31 : vector<32x64xi1>, vector<32x64xf32>
      %c0_18 = arith.constant 0 : index
      %c0_19 = arith.constant 0 : index
      %33 = vector.load %arg5[%c0_18, %c0_19] : memref<32x64xf32, #tpu.memory_space<vmem>>, vector<32x64xf32>
      tpu.vector_store %arg5[%c0_18, %c0_19], %32 {strides = array<i32>} : memref<32x64xf32, #tpu.memory_space<vmem>>, vector<32x64xf32>,
    } else {
    }
    return
  }
  func.func @transform_0(%arg0: i32, %arg1: i32) -> (i32, i32) {
    %c0_i32 = arith.constant 0 : i32
    %c0_i32_0 = arith.constant 0 : i32
    return %arg1, %c0_i32 : i32, i32
  }
  func.func @transform_1(%arg0: i32, %arg1: i32) -> (i32, i32) {
    %c0_i32 = arith.constant 0 : i32
    %c0_i32_0 = arith.constant 0 : i32
    %c0_i32_1 = arith.constant 0 : i32
    return %c0_i32, %c0_i32_0 : i32, i32
  }
  func.func @transform_2(%arg0: i32, %arg1: i32) -> (i32, i32) {
    %c0_i32 = arith.constant 0 : i32
    %c0_i32_0 = arith.constant 0 : i32
    %c0_i32_1 = arith.constant 0 : i32
    return %c0_i32, %c0_i32_0 : i32, i32
  }
  func.func @transform_3(%arg0: i32, %arg1: i32) -> (i32, i32) {
    %0 = arith.muli %arg1, %arg0 : i32
    %c0_i32 = arith.constant 0 : i32
    %c0_i32_0 = arith.constant 0 : i32
    return %0, %c0_i32 : i32, i32
  }
}

</mosaic_0001>

<llo_original>
// kernel: cnn_forward.3
$region0: #{cnn_forward.3}
  #allocation0 [shape = 'u32[]', space=smem, size = 0x4, offset = 0x4, fixed_abs, tag = 'smem constant byte address 0x4 - core index']
  #allocation1 [shape = 'u32[144,128]{1,0:T(1,128)}', space=vmem, size = 0x12000, scoped, tag = 'internal scratch']
  #allocation2 [shape = 'f32[1,32]{1,0:T(1,128)}', space=vmem, size = 0x200, scoped, tag = 'scratch operand']
  #allocation3 [shape = 'f32[1,32]{1,0:T(1,128)}', space=vmem, size = 0x200, scoped, tag = 'scratch operand']
  #allocation4 [shape = 'f32[1,32]{1,0:T(1,128)}', space=vmem, size = 0x200, scoped, tag = 'scratch operand']
  #allocation5 [shape = 'f32[1,32]{1,0:T(1,128)}', space=vmem, size = 0x200, scoped, tag = 'scratch operand']
  %s0 = inlined_call_operand.vmem [shape: bf16[112,256], index: 0, kind: input, shape index: {}]
  %s1 = inlined_call_operand.vmem [shape: bf16[256,32], index: 1, kind: input, shape index: {}]
  %s2 = inlined_call_operand.vmem [shape: f32[2,32], index: 2, kind: input, shape index: {}]
  %s3 = inlined_call_operand.vmem [shape: bf16[112,32], index: 3, kind: output, shape index: {}]
  %s4 = sld [smem:[#allocation0]]
  $region61: #{cnn_forward.3} parent=0
    _
  %s6 = ssub.s32 1, %s4
  %s7 = scalar_select 0, %s6, %s4
  loop: start=0, step=1, limit=4
  $region2: #{cnn_forward.3} parent=0 // loop_pre_header
    _
  $region3: #{cnn_forward.3} parent=0 // loop_header
    %s9 = sphi 0, %s13
    %p10 = scmp.ge.s32.totalorder %s9, 4
    %s16 = sphi 0, %s28
    %s17 = sphi 0, %s24
    %s18 = sphi 0, %s16
    %s19 = sphi 0, %s17
    %s20 = sphi 0, %s18
    %s21 = sphi 0, %s19
    %s31 = sphi 0, %s33
    %s34 = sphi 0, %s31
    %s35 = sphi 0, %s34
    %s51 = sphi 0, %s35
    %s55 = sphi 0, %s55
    %s57 = sphi 0, %s55
    %s58 = sphi 0, %s57
    %s72 = sphi 0, %s58
    %s76 = sphi 0, %s76
    %s78 = sphi 0, %s76
    %s79 = sphi 0, %s78
    %s93 = sphi 0, %s79
    %s101 = sphi 0, %s103
    %s104 = sphi 0, %s101
    %s105 = sphi 0, %s104
    %s121 = sphi 0, %s105
  $region4: #{cnn_forward.3} parent=0 // loop_header_branch
    %12 = sbr.rel (%p10) target = $region8
  $region5: #{cnn_forward.3} parent=0 // loop_body
    %s14 = ssub.s32 %s9, 1
    %s15 = ssub.s32 %s9, 2
    %s22 = sadd.s32 1, %s17
    %p23 = scmp.ge.s32.totalorder %s22, 1
    %s24 = scalar_select %p23, 0, %s22
    %s25 = sadd.s32 1, %s16
    %s26 = scalar_select %p23, %s25, %s16
    %p27 = scmp.ge.s32.totalorder %s26, 2
    %s28 = scalar_select %p27, 0, %s26
    %s29 = ssub.s32 %s17, %s24
    %p30 = scmp.eq.s32.totalorder %s29, 0
    %s32 = sadd.s32 %s31, 1
    %s33 = scalar_select %p30, %s31, %s32
    %p36 = pneg %p30
    %p37 = scmp.eq.s32.totalorder %s9, 1
    %p38 = por %p36, %p37
    %p39 = scmp.ne.s32.totalorder %s31, %s34
    %p40 = scmp.eq.s32.totalorder %s9, 0
    %p41 = por %p39, %p40
    %p42 = scmp.ne.s32.totalorder %s31, %s34
    %p43 = scmp.eq.s32.totalorder %s14, 1
    %p44 = por %p42, %p43
    %p45 = scmp.ne.s32.totalorder %s34, %s35
    %p46 = scmp.eq.s32.totalorder %s14, 0
    %p47 = por %p45, %p46
    %p48 = scmp.ne.s32.totalorder %s34, %s35
    %p49 = scmp.eq.s32.totalorder %s15, 1
    %p50 = por %p48, %p49
    %p52 = scmp.ne.s32.totalorder %s35, %s51
    %p53 = scmp.eq.s32.totalorder %s15, 0
    %p54 = por %p52, %p53
    %s56 = sadd.s32 %s55, 1
    %p59 = scmp.eq.s32.totalorder %s9, 1
    %p60 = scmp.ne.s32.totalorder %s55, %s57
    %p61 = scmp.eq.s32.totalorder %s9, 0
    %p62 = por %p60, %p61
    %p63 = scmp.ne.s32.totalorder %s55, %s57
    %p64 = scmp.eq.s32.totalorder %s14, 1
    %p65 = por %p63, %p64
    %p66 = scmp.ne.s32.totalorder %s57, %s58
    %p67 = scmp.eq.s32.totalorder %s14, 0
    %p68 = por %p66, %p67
    %p69 = scmp.ne.s32.totalorder %s57, %s58
    %p70 = scmp.eq.s32.totalorder %s15, 1
    %p71 = por %p69, %p70
    %p73 = scmp.ne.s32.totalorder %s58, %s72
    %p74 = scmp.eq.s32.totalorder %s15, 0
    %p75 = por %p73, %p74
    %s77 = sadd.s32 %s76, 1
    %p80 = scmp.eq.s32.totalorder %s9, 1
    %p81 = scmp.ne.s32.totalorder %s76, %s78
    %p82 = scmp.eq.s32.totalorder %s9, 0
    %p83 = por %p81, %p82
    %p84 = scmp.ne.s32.totalorder %s76, %s78
    %p85 = scmp.eq.s32.totalorder %s14, 1
    %p86 = por %p84, %p85
    %p87 = scmp.ne.s32.totalorder %s78, %s79
    %p88 = scmp.eq.s32.totalorder %s14, 0
    %p89 = por %p87, %p88
    %p90 = scmp.ne.s32.totalorder %s78, %s79
    %p91 = scmp.eq.s32.totalorder %s15, 1
    %p92 = por %p90, %p91
    %p94 = scmp.ne.s32.totalorder %s79, %s93
    %p95 = scmp.eq.s32.totalorder %s15, 0
    %p96 = por %p94, %p95
    %s97 = smul.u32 %s17, %s16
    %s98 = smul.u32 %s24, %s28
    %s99 = ssub.s32 %s97, %s98
    %p100 = scmp.eq.s32.totalorder %s99, 0
    %s102 = sadd.s32 %s101, 1
    %s103 = scalar_select %p100, %s101, %s102
    %p106 = pneg %p100
    %p107 = scmp.eq.s32.totalorder %s9, 1
    %p108 = por %p106, %p107
    %p109 = scmp.ne.s32.totalorder %s101, %s104
    %p110 = scmp.eq.s32.totalorder %s9, 0
    %p111 = por %p109, %p110
    %p112 = scmp.ne.s32.totalorder %s101, %s104
    %p113 = scmp.eq.s32.totalorder %s14, 1
    %p114 = por %p112, %p113
    %p115 = scmp.ne.s32.totalorder %s104, %s105
    %p116 = scmp.eq.s32.totalorder %s14, 0
    %p117 = por %p115, %p116
    %p118 = scmp.ne.s32.totalorder %s104, %s105
    %p119 = scmp.eq.s32.totalorder %s15, 1
    %p120 = por %p118, %p119
    %p122 = scmp.ne.s32.totalorder %s105, %s121
    %p123 = scmp.eq.s32.totalorder %s15, 0
    %p124 = por %p122, %p123
    %p125 = scmp.le.s32.totalorder 1, %s9
    %p126 = scmp.lt.s32.totalorder %s9, 3
    %p127 = pnand %p125, %p126
    %p128 = pneg %p127
    // Predicated region
    $region9: #{cnn_forward.3} parent=5 // pred_check
      _
    $region10: #{cnn_forward.3} parent=5 // pred_check_branch
      %130 = sbr.rel (%p127) target = $region12
    $region11: #{cnn_forward.3} parent=5 // pred_region
      %s131 = ssub.s32 %s9, 1
      // Predicated region
      $region13: #{cnn_forward.3} parent=11 // pred_check
        %p132 = pneg %p47
      $region14: #{cnn_forward.3} parent=11 // pred_check_branch
        %134 = sbr.rel (%p132) target = $region16
      $region15: #{cnn_forward.3} parent=11 // pred_region
        %s135 = smul.u32 14, %s19
        %p136 = scmp.lt.s32.totalorder %s135, 13
        %s137 = scalar_select %p136, %s135, 13
        %s138 = smul.addr %s137, 2
        %s139 = smul.addr %s138, 4
        %s140 = scalar_lea.vmem %s0, %s139
        %s141 = smul.u32 14, %s19
      $region16: #{cnn_forward.3} parent=11 // pred_fallthru
        _
      // Predicated region
      $region17: #{cnn_forward.3} parent=11 // pred_check
        %p142 = pneg %p68
      $region18: #{cnn_forward.3} parent=11 // pred_check_branch
        %144 = sbr.rel (%p142) target = $region20
      $region19: #{cnn_forward.3} parent=11 // pred_region
        _
      $region20: #{cnn_forward.3} parent=11 // pred_fallthru
        _
      // Predicated region
      $region21: #{cnn_forward.3} parent=11 // pred_check
        %p145 = pneg %p89
      $region22: #{cnn_forward.3} parent=11 // pred_check_branch
        %147 = sbr.rel (%p145) target = $region24
      $region23: #{cnn_forward.3} parent=11 // pred_region
        _
      $region24: #{cnn_forward.3} parent=11 // pred_fallthru
        _
    $region12: #{cnn_forward.3} parent=5 // pred_fallthru
      _
    %p148 = scmp.lt.s32.totalorder %s9, 2
    // Predicated region
    $region25: #{cnn_forward.3} parent=5 // pred_check
      %p149 = pneg %p148
    $region26: #{cnn_forward.3} parent=5 // pred_check_branch
      %151 = sbr.rel (%p149) target = $region28
    $region27: #{cnn_forward.3} parent=5 // pred_region
      _
    $region28: #{cnn_forward.3} parent=5 // pred_fallthru
      _
    %p152 = scmp.le.s32.totalorder 1, %s9
    %p153 = scmp.lt.s32.totalorder %s9, 3
    %p154 = pnand %p152, %p153
    %p155 = pneg %p154
    // Predicated region
    $region29: #{cnn_forward.3} parent=5 // pred_check
      _
    $region30: #{cnn_forward.3} parent=5 // pred_check_branch
      %157 = sbr.rel (%p154) target = $region32
    $region31: #{cnn_forward.3} parent=5 // pred_region
      %s158 = ssub.s32 %s9, 1
      %s159 = smul.u32 14, %s19
      %p160 = scmp.lt.s32.totalorder %s159, 13
      %s161 = scalar_select %p160, %s159, 13
      %s162 = smul.addr %s161, 2
      %s163 = smul.addr %s162, 4
      %s164 = scalar_lea.vmem %s0, %s163
      %p165 = pneg %p47
      %p166 = pneg %p44
      %p167 = pneg %p68
      %p168 = pneg %p65
      %p169 = pneg %p89
      %p170 = pneg %p86
      %p171 = pneg %p117
      %p172 = pneg %p114
      %s173 = smul.u32 %s19, %s18
      %s174 = smul.u32 14, %s173
      %p175 = scmp.lt.s32.totalorder %s174, 13
      %s176 = scalar_select %p175, %s174, 13
      %s177 = smul.addr %s176, 4
      %s178 = scalar_lea.vmem %s3, %s177
      %s179 = smul.u32 14, %s19
      %p180 = scmp.lt.s32.totalorder %s179, 13
      %s181 = scalar_select %p180, %s179, 13
      %s182 = smul.addr %s181, 2
      %s183 = smul.addr %s182, 4
      %s184 = scalar_lea.vmem %s0, %s183
      %s185 = smul.u32 14, %s19
      %s186 = smul.u32 %s19, %s18
      %s187 = smul.u32 14, %s186
      %p188 = scmp.lt.s32.totalorder %s187, 13
      %s189 = scalar_select %p188, %s187, 13
      %s190 = smul.addr %s189, 4
      %s191 = scalar_lea.vmem %s3, %s190
      %s192 = smul.u32 %s19, %s18
      %s193 = smul.u32 14, %s192
      %v195 = vld [vmem:[%s184] sm:$0xff]
      %v196 = vld [vmem:[%s184 + $0x8] sm:$0xff]
      %v197 = vld [vmem:[%s184 + $0x10] sm:$0xff]
      %v198 = vld [vmem:[%s184 + $0x18] sm:$0xff]
      %v199 = vld [vmem:[%s184 + $0x20] sm:$0xff]
      %v200 = vld [vmem:[%s184 + $0x28] sm:$0xff]
      %v201 = vld [vmem:[%s184 + $0x30] sm:$0xff]
      %v202 = vld [vmem:[%s184 + $0x38] sm:$0xff]
      %v203 = vld [vmem:[%s184 + $0x40] sm:$0xff]
      %v204 = vld [vmem:[%s184 + $0x48] sm:$0xff]
      %v205 = vld [vmem:[%s184 + $0x50] sm:$0xff]
      %v206 = vld [vmem:[%s184 + $0x58] sm:$0xff]
      %v207 = vld [vmem:[%s184 + $0x60] sm:$0xff]
      %v208 = vld [vmem:[%s184 + $0x68] sm:$0xff]
      %v209 = vld [vmem:[%s1] sm:$0xf]
      %v210 = vld [vmem:[%s1 + $0x4] sm:$0xf]
      %v211 = vld [vmem:[%s1 + $0x8] sm:$0xf]
      %v212 = vld [vmem:[%s1 + $0xc] sm:$0xf]
      %v213 = vld [vmem:[%s1 + $0x10] sm:$0xf]
      %v214 = vld [vmem:[%s1 + $0x14] sm:$0xf]
      %v215 = vld [vmem:[%s1 + $0x18] sm:$0xf]
      %v216 = vld [vmem:[%s1 + $0x1c] sm:$0xf]
      %v217 = vld [vmem:[%s1 + $0x20] sm:$0xf]
      %v218 = vld [vmem:[%s1 + $0x24] sm:$0xf]
      %v219 = vld [vmem:[%s1 + $0x28] sm:$0xf]
      %v220 = vld [vmem:[%s1 + $0x2c] sm:$0xf]
      %v221 = vld [vmem:[%s1 + $0x30] sm:$0xf]
      %v222 = vld [vmem:[%s1 + $0x34] sm:$0xf]
      %v223 = vld [vmem:[%s1 + $0x38] sm:$0xf]
      %v224 = vld [vmem:[%s1 + $0x3c] sm:$0xf]
      %v225 = vld [vmem:[%s1 + $0x40] sm:$0xf]
      %v226 = vld [vmem:[%s1 + $0x44] sm:$0xf]
      %v227 = vld [vmem:[%s1 + $0x48] sm:$0xf]
      %v228 = vld [vmem:[%s1 + $0x4c] sm:$0xf]
      %v229 = vld [vmem:[%s1 + $0x50] sm:$0xf]
      %v230 = vld [vmem:[%s1 + $0x54] sm:$0xf]
      %v231 = vld [vmem:[%s1 + $0x58] sm:$0xf]
      %v232 = vld [vmem:[%s1 + $0x5c] sm:$0xf]
      %v233 = vld [vmem:[%s1 + $0x60] sm:$0xf]
      %v234 = vld [vmem:[%s1 + $0x64] sm:$0xf]
      %v235 = vld [vmem:[%s1 + $0x68] sm:$0xf]
      %v236 = vld [vmem:[%s1 + $0x6c] sm:$0xf]
      %v237 = vld [vmem:[%s1 + $0x70] sm:$0xf]
      %v238 = vld [vmem:[%s1 + $0x74] sm:$0xf]
      %v239 = vld [vmem:[%s1 + $0x78] sm:$0xf]
      %v240 = vld [vmem:[%s1 + $0x7c] sm:$0xf]
      %v255 = vunpack.c.l.b16 %v195
      %v256 = vunpack.c.h.b16 %v195
      %v257 = vunpack.c.l.b16 %v196
      %v258 = vunpack.c.h.b16 %v196
      %v259 = vunpack.c.l.b16 %v197
      %v260 = vunpack.c.h.b16 %v197
      %v261 = vunpack.c.l.b16 %v198
      %v262 = vunpack.c.h.b16 %v198
      %v263 = vunpack.c.l.b16 %v199
      %v264 = vunpack.c.h.b16 %v199
      %v265 = vunpack.c.l.b16 %v200
      %v266 = vunpack.c.h.b16 %v200
      %v267 = vunpack.c.l.b16 %v201
      %v268 = vunpack.c.h.b16 %v201
      %v269 = vunpack.c.l.b16 %v202
      %v270 = vunpack.c.h.b16 %v202
      %v271 = vunpack.c.l.b16 %v203
      %v272 = vunpack.c.h.b16 %v203
      %v273 = vunpack.c.l.b16 %v204
      %v274 = vunpack.c.h.b16 %v204
      %v275 = vunpack.c.l.b16 %v205
      %v276 = vunpack.c.h.b16 %v205
      %v277 = vunpack.c.l.b16 %v206
      %v278 = vunpack.c.h.b16 %v206
      %v279 = vunpack.c.l.b16 %v207
      %v280 = vunpack.c.h.b16 %v207
      %v281 = vunpack.c.l.b16 %v208
      %v282 = vunpack.c.h.b16 %v208
      %v283 = vpack.c.b16 %v257, %v255
      %v284 = vpack.c.b16 %v258, %v256
      %v285 = vpack.c.b16 %v261, %v259
      %v286 = vpack.c.b16 %v262, %v260
      %v287 = vpack.c.b16 %v265, %v263
      %v288 = vpack.c.b16 %v266, %v264
      %v289 = vpack.c.b16 %v269, %v267
      %v290 = vpack.c.b16 %v270, %v268
      %v291 = vpack.c.b16 %v273, %v271
      %v292 = vpack.c.b16 %v274, %v272
      %v293 = vpack.c.b16 %v277, %v275
      %v294 = vpack.c.b16 %v278, %v276
      %v295 = vpack.c.b16 %v281, %v279
      %v296 = vpack.c.b16 %v282, %v280
      %v343 = vunpack.c.l.b16 %v209
      %v344 = vunpack.c.l.b16 %v210
      %v345 = vunpack.c.l.b16 %v211
      %v346 = vunpack.c.l.b16 %v212
      %v347 = vunpack.c.l.b16 %v213
      %v348 = vunpack.c.l.b16 %v214
      %v349 = vunpack.c.l.b16 %v215
      %v350 = vunpack.c.l.b16 %v216
      %v351 = vunpack.c.l.b16 %v217
      %v352 = vunpack.c.l.b16 %v218
      %v353 = vunpack.c.l.b16 %v219
      %v354 = vunpack.c.l.b16 %v220
      %v355 = vunpack.c.l.b16 %v221
      %v356 = vunpack.c.l.b16 %v222
      %v357 = vunpack.c.l.b16 %v223
      %v358 = vunpack.c.l.b16 %v224
      %v359 = vunpack.c.l.b16 %v225
      %v360 = vunpack.c.l.b16 %v226
      %v361 = vunpack.c.l.b16 %v227
      %v362 = vunpack.c.l.b16 %v228
      %v363 = vunpack.c.l.b16 %v229
      %v364 = vunpack.c.l.b16 %v230
      %v365 = vunpack.c.l.b16 %v231
      %v366 = vunpack.c.l.b16 %v232
      %v367 = vunpack.c.l.b16 %v233
      %v368 = vunpack.c.l.b16 %v234
      %v369 = vunpack.c.l.b16 %v235
      %v370 = vunpack.c.l.b16 %v236
      %v371 = vunpack.c.l.b16 %v237
      %v372 = vunpack.c.l.b16 %v238
      %v373 = vunpack.c.l.b16 %v239
      %v374 = vunpack.c.l.b16 %v240
      %v375 = vpack.c.b16 %v344, %v343
      %v376 = vpack.c.b16 %v346, %v345
      %v377 = vpack.c.b16 %v348, %v347
      %v378 = vpack.c.b16 %v350, %v349
      %v379 = vpack.c.b16 %v352, %v351
      %v380 = vpack.c.b16 %v354, %v353
      %v381 = vpack.c.b16 %v356, %v355
      %v382 = vpack.c.b16 %v358, %v357
      %v383 = vpack.c.b16 %v360, %v359
      %v384 = vpack.c.b16 %v362, %v361
      %v385 = vpack.c.b16 %v364, %v363
      %v386 = vpack.c.b16 %v366, %v365
      %v387 = vpack.c.b16 %v368, %v367
      %v388 = vpack.c.b16 %v370, %v369
      %v389 = vpack.c.b16 %v372, %v371
      %v390 = vpack.c.b16 %v374, %v373
      %407 = vmatprep.subr.bf16.mxu0 0
      %408 = vmatpush1.bf16.msra.mxu0 %v382
      %409 = vmatprep.subr.bf16.mxu0 0
      %410 = vmatpush1.bf16.msra.mxu0 %v381
      %411 = vmatprep.subr.bf16.mxu0 0
      %412 = vmatpush1.bf16.msra.mxu0 %v380
      %413 = vmatprep.subr.bf16.mxu0 0
      %414 = vmatpush1.bf16.msra.mxu0 %v379
      %415 = vmatprep.subr.bf16.mxu0 0
      %416 = vmatpush1.bf16.msra.mxu0 %v378
      %417 = vmatprep.subr.bf16.mxu0 0
      %418 = vmatpush1.bf16.msra.mxu0 %v377
      %419 = vmatprep.subr.bf16.mxu0 0
      %420 = vmatpush1.bf16.msra.mxu0 %v376
      %421 = vmatprep.subr.bf16.mxu0 0
      %422 = vmatpush1.bf16.msra.mxu0 %v375
      %423 = vmatprep.subr.bf16.mxu0 0
      %424 = vmatpush2.bf16.msra.mxu0 %v390
      %425 = vmatprep.subr.bf16.mxu0 0
      %426 = vmatpush2.bf16.msra.mxu0 %v389
      %427 = vmatprep.subr.bf16.mxu0 0
      %428 = vmatpush2.bf16.msra.mxu0 %v388
      %429 = vmatprep.subr.bf16.mxu0 0
      %430 = vmatpush2.bf16.msra.mxu0 %v387
      %431 = vmatprep.subr.bf16.mxu0 0
      %432 = vmatpush2.bf16.msra.mxu0 %v386
      %433 = vmatprep.subr.bf16.mxu0 0
      %434 = vmatpush2.bf16.msra.mxu0 %v385
      %435 = vmatprep.subr.bf16.mxu0 0
      %436 = vmatpush2.bf16.msra.mxu0 %v384
      %437 = vmatprep.subr.bf16.mxu0 0
      %438 = vmatpush2.bf16.msra.mxu0 %v383
      %439 = vmatprep.mubr.bf16.mxu0 %v284
      %440 = vmatmul.mubr.bf16.gmra.mxu0 %v283
      %v441 = vpop.f32.mrf.mxu0
      %v442 = vadd.f32 0.0, %v441
      %v443 = vpop.f32.mrf.mxu0
      %v444 = vpop.f32.mrf.mxu0
      %v445 = vadd.f32 0.0, %v444
      %v446 = vpop.f32.mrf.mxu0
      %447 = vmatprep.mubr.bf16.mxu0 %v286
      %448 = vmatmul.mubr.bf16.gmra.mxu0 %v285
      %v449 = vpop.f32.mrf.mxu0
      %v450 = vadd.f32 0.0, %v449
      %v451 = vpop.f32.mrf.mxu0
      %v452 = vpop.f32.mrf.mxu0
      %v453 = vadd.f32 0.0, %v452
      %v454 = vpop.f32.mrf.mxu0
      %455 = vmatprep.mubr.bf16.mxu0 %v288
      %456 = vmatmul.mubr.bf16.gmra.mxu0 %v287
      %v457 = vpop.f32.mrf.mxu0
      %v458 = vadd.f32 0.0, %v457
      %v459 = vpop.f32.mrf.mxu0
      %v460 = vpop.f32.mrf.mxu0
      %v461 = vadd.f32 0.0, %v460
      %v462 = vpop.f32.mrf.mxu0
      %463 = vmatprep.mubr.bf16.mxu0 %v290
      %464 = vmatmul.mubr.bf16.gmra.mxu0 %v289
      %v465 = vpop.f32.mrf.mxu0
      %v466 = vadd.f32 0.0, %v465
      %v467 = vpop.f32.mrf.mxu0
      %v468 = vpop.f32.mrf.mxu0
      %v469 = vadd.f32 0.0, %v468
      %v470 = vpop.f32.mrf.mxu0
      %471 = vmatprep.mubr.bf16.mxu0 %v292
      %472 = vmatmul.mubr.bf16.gmra.mxu0 %v291
      %v473 = vpop.f32.mrf.mxu0
      %v474 = vadd.f32 0.0, %v473
      %v475 = vpop.f32.mrf.mxu0
      %v476 = vpop.f32.mrf.mxu0
      %v477 = vadd.f32 0.0, %v476
      %v478 = vpop.f32.mrf.mxu0
      %479 = vmatprep.mubr.bf16.mxu0 %v294
      %480 = vmatmul.mubr.bf16.gmra.mxu0 %v293
      %v481 = vpop.f32.mrf.mxu0
      %v482 = vadd.f32 0.0, %v481
      %v483 = vpop.f32.mrf.mxu0
      %v484 = vpop.f32.mrf.mxu0
      %v485 = vadd.f32 0.0, %v484
      %v486 = vpop.f32.mrf.mxu0
      %487 = vmatprep.mubr.bf16.mxu0 %v296
      %488 = vmatmul.mubr.bf16.gmra.mxu0 %v295
      %v489 = vpop.f32.mrf.mxu0
      %v490 = vadd.f32 0.0, %v489
      %v491 = vpop.f32.mrf.mxu0
      %v492 = vpop.f32.mrf.mxu0
      %v493 = vadd.f32 0.0, %v492
      %v494 = vpop.f32.mrf.mxu0
      %495 = vdwg.mxu0
      %p496 = scmp.eq.s32.totalorder %s18, 0
      %p497 = scmp.eq.s32.totalorder %s19, 0
      %p498 = pnand %p496, %p497
      %p499 = pneg %p498
      // Predicated region
      $region33: #{cnn_forward.3} parent=31 // pred_check
        _
      $region34: #{cnn_forward.3} parent=31 // pred_check_branch
        %501 = sbr.rel (%p498) target = $region36
      $region35: #{cnn_forward.3} parent=31 // pred_region
        %vm502 = vcmask 253952
        %503 = vst.msk [vmem:[#allocation2] sm:$0x1] %vm502, 0.0
        %504 = vst.msk [vmem:[#allocation3] sm:$0x1] %vm502, 0.0
      $region36: #{cnn_forward.3} parent=31 // pred_fallthru
        _
      // Predicated region
      $region37: #{cnn_forward.3} parent=31 // pred_check
        %p505 = pneg %p496
      $region38: #{cnn_forward.3} parent=31 // pred_check_branch
        %507 = sbr.rel (%p505) target = $region40
      $region39: #{cnn_forward.3} parent=31 // pred_region
        %v508 = vld [vmem:[#allocation2] sm:$0x1]
        %vm509 = vcmask 261120
        %v510 = vsel %vm509, %v442, 0.0
        %v511 = vsel %vm509, %v445, 0.0
        %v512 = vadd.f32 %v510, %v511
        %v513 = vsel %vm509, %v450, 0.0
        %v514 = vadd.f32 %v512, %v513
        %v515 = vsel %vm509, %v453, 0.0
        %v516 = vadd.f32 %v514, %v515
        %v517 = vsel %vm509, %v458, 0.0
        %v518 = vadd.f32 %v516, %v517
        %v519 = vsel %vm509, %v461, 0.0
        %v520 = vadd.f32 %v518, %v519
        %v521 = vsel %vm509, %v466, 0.0
        %v522 = vadd.f32 %v520, %v521
        %v523 = vsel %vm509, %v469, 0.0
        %v524 = vadd.f32 %v522, %v523
        %v525 = vsel %vm509, %v474, 0.0
        %v526 = vadd.f32 %v524, %v525
        %v527 = vsel %vm509, %v477, 0.0
        %v528 = vadd.f32 %v526, %v527
        %v529 = vsel %vm509, %v482, 0.0
        %v530 = vadd.f32 %v528, %v529
        %v531 = vsel %vm509, %v485, 0.0
        %v532 = vadd.f32 %v530, %v531
        %v533 = vsel %vm509, %v490, 0.0
        %v534 = vadd.f32 %v532, %v533
        %v535 = vsel %vm509, %v493, 0.0
        %v536 = vadd.f32 %v534, %v535
        %v537 = vrot.slane %v536, 4
        %v538 = vadd.f32 %v536, %v537
        %v539 = vrot.slane %v538, 2
        %v540 = vadd.f32 %v538, %v539
        %v541 = vrot.slane %v540, 1
        %v542 = vadd.f32 %v540, %v541
        %v543 = vadd.f32 %v508, %v542
        %vm544 = vcmask 253952
        %545 = vst.msk [vmem:[#allocation2] sm:$0x1] %vm544, %v543
        %v546 = vld [vmem:[#allocation3] sm:$0x1]
        %v547 = vmul.f32 %v442, %v442
        %v548 = vmul.f32 %v445, %v445
        %v549 = vmul.f32 %v450, %v450
        %v550 = vmul.f32 %v453, %v453
        %v551 = vmul.f32 %v458, %v458
        %v552 = vmul.f32 %v461, %v461
        %v553 = vmul.f32 %v466, %v466
        %v554 = vmul.f32 %v469, %v469
        %v555 = vmul.f32 %v474, %v474
        %v556 = vmul.f32 %v477, %v477
        %v557 = vmul.f32 %v482, %v482
        %v558 = vmul.f32 %v485, %v485
        %v559 = vmul.f32 %v490, %v490
        %v560 = vmul.f32 %v493, %v493
        %v561 = vsel %vm509, %v547, 0.0
        %v562 = vsel %vm509, %v548, 0.0
        %v563 = vadd.f32 %v561, %v562
        %v564 = vsel %vm509, %v549, 0.0
        %v565 = vadd.f32 %v563, %v564
        %v566 = vsel %vm509, %v550, 0.0
        %v567 = vadd.f32 %v565, %v566
        %v568 = vsel %vm509, %v551, 0.0
        %v569 = vadd.f32 %v567, %v568
        %v570 = vsel %vm509, %v552, 0.0
        %v571 = vadd.f32 %v569, %v570
        %v572 = vsel %vm509, %v553, 0.0
        %v573 = vadd.f32 %v571, %v572
        %v574 = vsel %vm509, %v554, 0.0
        %v575 = vadd.f32 %v573, %v574
        %v576 = vsel %vm509, %v555, 0.0
        %v577 = vadd.f32 %v575, %v576
        %v578 = vsel %vm509, %v556, 0.0
        %v579 = vadd.f32 %v577, %v578
        %v580 = vsel %vm509, %v557, 0.0
        %v581 = vadd.f32 %v579, %v580
        %v582 = vsel %vm509, %v558, 0.0
        %v583 = vadd.f32 %v581, %v582
        %v584 = vsel %vm509, %v559, 0.0
        %v585 = vadd.f32 %v583, %v584
        %v586 = vsel %vm509, %v560, 0.0
        %v587 = vadd.f32 %v585, %v586
        %v588 = vrot.slane %v587, 4
        %v589 = vadd.f32 %v587, %v588
        %v590 = vrot.slane %v589, 2
        %v591 = vadd.f32 %v589, %v590
        %v592 = vrot.slane %v591, 1
        %v593 = vadd.f32 %v591, %v592
        %v594 = vadd.f32 %v546, %v593
        %595 = vst.msk [vmem:[#allocation3] sm:$0x1] %vm544, %v594
      $region40: #{cnn_forward.3} parent=31 // pred_fallthru
        _
      %p596 = scmp.eq.s32.totalorder %s18, 1
      %p597 = pnand %p596, %p497
      %p598 = pneg %p597
      // Predicated region
      $region41: #{cnn_forward.3} parent=31 // pred_check
        _
      $region42: #{cnn_forward.3} parent=31 // pred_check_branch
        %600 = sbr.rel (%p597) target = $region44
      $region43: #{cnn_forward.3} parent=31 // pred_region
        %v601 = vld [vmem:[#allocation2] sm:$0x1]
        %v602 = vmul.f32 %v601, 0.010204081
        %v603 = vld [vmem:[#allocation3] sm:$0x1]
        %v604 = vmul.f32 %v603, 0.010204081
        %v605 = vmul.f32 %v602, %v602
        %v606 = vsub.f32 %v604, %v605
        %v607 = vmax.f32 %v606, 0.0
        %v608 = vld [vmem:[%s2] sm:$0x1]
        %v609 = vld [vmem:[%s2 + $0x1] sm:$0x1]
        %v610 = vadd.f32 %v607, 1e-05
        %v611 = vrsqrt.pop %v610
        %v612 = vmul.f32 %v608, %v611
        %vm613 = vcmask 253952
        %614 = vst.msk [vmem:[#allocation4] sm:$0x1] %vm613, %v612
        %v615 = vmul.f32 %v602, %v612
        %v616 = vsub.f32 %v609, %v615
        %617 = vst.msk [vmem:[#allocation5] sm:$0x1] %vm613, %v616
      $region44: #{cnn_forward.3} parent=31 // pred_fallthru
        _
      // Predicated region
      $region45: #{cnn_forward.3} parent=31 // pred_check
        %p618 = pneg %p596
      $region46: #{cnn_forward.3} parent=31 // pred_check_branch
        %620 = sbr.rel (%p618) target = $region48
      $region47: #{cnn_forward.3} parent=31 // pred_region
        %v621 = vld [vmem:[#allocation4] sm:$0x1]
        %v623 = vlaneseq
        %v624 = vshrl.u32 %v623, 7
        %v625 = vsub.s32 0, %v624
        %v626 = vrot.slane %v621, %v625
        %v628 = vmul.f32 %v442, %v626
        %v629 = vmul.f32 %v445, %v626
        %v630 = vmul.f32 %v450, %v626
        %v631 = vmul.f32 %v453, %v626
        %v632 = vmul.f32 %v458, %v626
        %v633 = vmul.f32 %v461, %v626
        %v634 = vmul.f32 %v466, %v626
        %v635 = vmul.f32 %v469, %v626
        %v636 = vmul.f32 %v474, %v626
        %v637 = vmul.f32 %v477, %v626
        %v638 = vmul.f32 %v482, %v626
        %v639 = vmul.f32 %v485, %v626
        %v640 = vmul.f32 %v490, %v626
        %v641 = vmul.f32 %v493, %v626
        %v642 = vld [vmem:[#allocation5] sm:$0x1]
        %v644 = vlaneseq
        %v645 = vshrl.u32 %v644, 7
        %v646 = vsub.s32 0, %v645
        %v647 = vrot.slane %v642, %v646
        %v649 = vadd.f32 %v628, %v647
        %v650 = vadd.f32 %v629, %v647
        %v651 = vadd.f32 %v630, %v647
        %v652 = vadd.f32 %v631, %v647
        %v653 = vadd.f32 %v632, %v647
        %v654 = vadd.f32 %v633, %v647
        %v655 = vadd.f32 %v634, %v647
        %v656 = vadd.f32 %v635, %v647
        %v657 = vadd.f32 %v636, %v647
        %v658 = vadd.f32 %v637, %v647
        %v659 = vadd.f32 %v638, %v647
        %v660 = vadd.f32 %v639, %v647
        %v661 = vadd.f32 %v640, %v647
        %v662 = vadd.f32 %v641, %v647
        %vm663 = vcmp.gt.f32.partialorder %v649, 0.0
        %vm664 = vcmp.gt.f32.partialorder %v650, 0.0
        %vm665 = vcmp.gt.f32.partialorder %v651, 0.0
        %vm666 = vcmp.gt.f32.partialorder %v652, 0.0
        %vm667 = vcmp.gt.f32.partialorder %v653, 0.0
        %vm668 = vcmp.gt.f32.partialorder %v654, 0.0
        %vm669 = vcmp.gt.f32.partialorder %v655, 0.0
        %vm670 = vcmp.gt.f32.partialorder %v656, 0.0
        %vm671 = vcmp.gt.f32.partialorder %v657, 0.0
        %vm672 = vcmp.gt.f32.partialorder %v658, 0.0
        %vm673 = vcmp.gt.f32.partialorder %v659, 0.0
        %vm674 = vcmp.gt.f32.partialorder %v660, 0.0
        %vm675 = vcmp.gt.f32.partialorder %v661, 0.0
        %vm676 = vcmp.gt.f32.partialorder %v662, 0.0
        %v677 = vmin.f32 %v649, 0.0
        %v678 = vmin.f32 %v650, 0.0
        %v679 = vmin.f32 %v651, 0.0
        %v680 = vmin.f32 %v652, 0.0
        %v681 = vmin.f32 %v653, 0.0
        %v682 = vmin.f32 %v654, 0.0
        %v683 = vmin.f32 %v655, 0.0
        %v684 = vmin.f32 %v656, 0.0
        %v685 = vmin.f32 %v657, 0.0
        %v686 = vmin.f32 %v658, 0.0
        %v687 = vmin.f32 %v659, 0.0
        %v688 = vmin.f32 %v660, 0.0
        %v689 = vmin.f32 %v661, 0.0
        %v690 = vmin.f32 %v662, 0.0
        %v691 = vmul.f32 %v677, 1.442695
        %v692 = vpow.pop %v691
        %v693 = vmul.f32 %v678, 1.442695
        %v694 = vpow.pop %v693
        %v695 = vmul.f32 %v679, 1.442695
        %v696 = vpow.pop %v695
        %v697 = vmul.f32 %v680, 1.442695
        %v698 = vpow.pop %v697
        %v699 = vmul.f32 %v681, 1.442695
        %v700 = vpow.pop %v699
        %v701 = vmul.f32 %v682, 1.442695
        %v702 = vpow.pop %v701
        %v703 = vmul.f32 %v683, 1.442695
        %v704 = vpow.pop %v703
        %v705 = vmul.f32 %v684, 1.442695
        %v706 = vpow.pop %v705
        %v707 = vmul.f32 %v685, 1.442695
        %v708 = vpow.pop %v707
        %v709 = vmul.f32 %v686, 1.442695
        %v710 = vpow.pop %v709
        %v711 = vmul.f32 %v687, 1.442695
        %v712 = vpow.pop %v711
        %v713 = vmul.f32 %v688, 1.442695
        %v714 = vpow.pop %v713
        %v715 = vmul.f32 %v689, 1.442695
        %v716 = vpow.pop %v715
        %v717 = vmul.f32 %v690, 1.442695
        %v718 = vpow.pop %v717
        %v719 = vsub.f32 %v692, 1.0
        %v720 = vsub.f32 %v694, 1.0
        %v721 = vsub.f32 %v696, 1.0
        %v722 = vsub.f32 %v698, 1.0
        %v723 = vsub.f32 %v700, 1.0
        %v724 = vsub.f32 %v702, 1.0
        %v725 = vsub.f32 %v704, 1.0
        %v726 = vsub.f32 %v706, 1.0
        %v727 = vsub.f32 %v708, 1.0
        %v728 = vsub.f32 %v710, 1.0
        %v729 = vsub.f32 %v712, 1.0
        %v730 = vsub.f32 %v714, 1.0
        %v731 = vsub.f32 %v716, 1.0
        %v732 = vsub.f32 %v718, 1.0
        %v733 = vsel %vm663, %v649, %v719
        %v734 = vsel %vm664, %v650, %v720
        %v735 = vsel %vm665, %v651, %v721
        %v736 = vsel %vm666, %v652, %v722
        %v737 = vsel %vm667, %v653, %v723
        %v738 = vsel %vm668, %v654, %v724
        %v739 = vsel %vm669, %v655, %v725
        %v740 = vsel %vm670, %v656, %v726
        %v741 = vsel %vm671, %v657, %v727
        %v742 = vsel %vm672, %v658, %v728
        %v743 = vsel %vm673, %v659, %v729
        %v744 = vsel %vm674, %v660, %v730
        %v745 = vsel %vm675, %v661, %v731
        %v746 = vsel %vm676, %v662, %v732
        %v747 = vpack.c.bf16 %v734, %v733
        %v748 = vpack.c.bf16 %v736, %v735
        %v749 = vpack.c.bf16 %v738, %v737
        %v750 = vpack.c.bf16 %v740, %v739
        %v751 = vpack.c.bf16 %v742, %v741
        %v752 = vpack.c.bf16 %v744, %v743
        %v753 = vpack.c.bf16 %v746, %v745
        %v761 = vunpack.c.l.b16 %v747
        %v762 = vunpack.c.h.b16 %v747
        %v763 = vunpack.c.l.b16 %v748
        %v764 = vunpack.c.h.b16 %v748
        %v765 = vunpack.c.l.b16 %v749
        %v766 = vunpack.c.h.b16 %v749
        %v767 = vunpack.c.l.b16 %v750
        %v768 = vunpack.c.h.b16 %v750
        %v769 = vunpack.c.l.b16 %v751
        %v770 = vunpack.c.h.b16 %v751
        %v771 = vunpack.c.l.b16 %v752
        %v772 = vunpack.c.h.b16 %v752
        %v773 = vunpack.c.l.b16 %v753
        %v774 = vunpack.c.h.b16 %v753
        %v775 = vpack.c.b16 %v761, %v761
        %v776 = vpack.c.b16 %v762, %v762
        %v777 = vpack.c.b16 %v763, %v763
        %v778 = vpack.c.b16 %v764, %v764
        %v779 = vpack.c.b16 %v765, %v765
        %v780 = vpack.c.b16 %v766, %v766
        %v781 = vpack.c.b16 %v767, %v767
        %v782 = vpack.c.b16 %v768, %v768
        %v783 = vpack.c.b16 %v769, %v769
        %v784 = vpack.c.b16 %v770, %v770
        %v785 = vpack.c.b16 %v771, %v771
        %v786 = vpack.c.b16 %v772, %v772
        %v787 = vpack.c.b16 %v773, %v773
        %v788 = vpack.c.b16 %v774, %v774
        %vm803 = vcmask 257024
        %804 = vst.msk [vmem:[%s191] sm:$0xf] %vm803, %v775
        %805 = vst.msk [vmem:[%s191 + $0x4] sm:$0xf] %vm803, %v776
        %806 = vst.msk [vmem:[%s191 + $0x8] sm:$0xf] %vm803, %v777
        %807 = vst.msk [vmem:[%s191 + $0xc] sm:$0xf] %vm803, %v778
        %808 = vst.msk [vmem:[%s191 + $0x10] sm:$0xf] %vm803, %v779
        %809 = vst.msk [vmem:[%s191 + $0x14] sm:$0xf] %vm803, %v780
        %810 = vst.msk [vmem:[%s191 + $0x18] sm:$0xf] %vm803, %v781
        %811 = vst.msk [vmem:[%s191 + $0x1c] sm:$0xf] %vm803, %v782
        %812 = vst.msk [vmem:[%s191 + $0x20] sm:$0xf] %vm803, %v783
        %813 = vst.msk [vmem:[%s191 + $0x24] sm:$0xf] %vm803, %v784
        %814 = vst.msk [vmem:[%s191 + $0x28] sm:$0xf] %vm803, %v785
        %815 = vst.msk [vmem:[%s191 + $0x2c] sm:$0xf] %vm803, %v786
        %816 = vst.msk [vmem:[%s191 + $0x30] sm:$0xf] %vm803, %v787
        %817 = vst.msk [vmem:[%s191 + $0x34] sm:$0xf] %vm803, %v788
      $region48: #{cnn_forward.3} parent=31 // pred_fallthru
        _
      %s818 = smul.u32 %s19, %s18
      %s819 = smul.u32 14, %s818
      %p820 = scmp.lt.s32.totalorder %s819, 13
      %s821 = scalar_select %p820, %s819, 13
      %s822 = smul.addr %s821, 4
      %s823 = scalar_lea.vmem %s3, %s822
      // Predicated region
      $region49: #{cnn_forward.3} parent=31 // pred_check
        %p824 = pneg %p114
      $region50: #{cnn_forward.3} parent=31 // pred_check_branch
        %826 = sbr.rel (%p824) target = $region52
      $region51: #{cnn_forward.3} parent=31 // pred_region
        %s827 = smul.u32 %s19, %s18
        %s828 = smul.u32 14, %s827
      $region52: #{cnn_forward.3} parent=31 // pred_fallthru
        _
    $region32: #{cnn_forward.3} parent=5 // pred_fallthru
      _
    %p829 = scmp.le.s32.totalorder 2, %s9
    // Predicated region
    $region53: #{cnn_forward.3} parent=5 // pred_check
      %p830 = pneg %p829
    $region54: #{cnn_forward.3} parent=5 // pred_check_branch
      %832 = sbr.rel (%p830) target = $region56
    $region55: #{cnn_forward.3} parent=5 // pred_region
      %s833 = ssub.s32 %s9, 2
      // Predicated region
      $region57: #{cnn_forward.3} parent=55 // pred_check
        %p834 = pneg %p120
      $region58: #{cnn_forward.3} parent=55 // pred_check_branch
        %836 = sbr.rel (%p834) target = $region60
      $region59: #{cnn_forward.3} parent=55 // pred_region
        %s837 = smul.u32 %s21, %s20
        %s838 = smul.u32 14, %s837
        %p839 = scmp.lt.s32.totalorder %s838, 13
        %s840 = scalar_select %p839, %s838, 13
        %s841 = smul.addr %s840, 4
        %s842 = scalar_lea.vmem %s3, %s841
      $region60: #{cnn_forward.3} parent=55 // pred_fallthru
        _
    $region56: #{cnn_forward.3} parent=5 // pred_fallthru
      _
  $region6: #{cnn_forward.3} parent=0 // loop_footer
    %s13 = sadd.s32 1, %s9
  $region7: #{cnn_forward.3} parent=0 // loop_footer_branch
    %8 = sbr.rel target = $region3
  $region8: #{cnn_forward.3} parent=0 // loop_exit
    _

// kernel: cnn_forward.4
$region0: #{cnn_forward.4}
  #allocation0 [shape = 'u32[]', space=smem, size = 0x4, offset = 0x4, fixed_abs, tag = 'smem constant byte address 0x4 - core index']
  #allocation1 [shape = 'u32[144,128]{1,0:T(1,128)}', space=vmem, size = 0x12000, scoped, tag = 'internal scratch']
  #allocation2 [shape = 'f32[1,64]{1,0:T(1,128)}', space=vmem, size = 0x200, scoped, tag = 'scratch operand']
  #allocation3 [shape = 'f32[1,64]{1,0:T(1,128)}', space=vmem, size = 0x200, scoped, tag = 'scratch operand']
  #allocation4 [shape = 'f32[1,64]{1,0:T(1,128)}', space=vmem, size = 0x200, scoped, tag = 'scratch operand']
  #allocation5 [shape = 'f32[1,64]{1,0:T(1,128)}', space=vmem, size = 0x200, scoped, tag = 'scratch operand']
  %s0 = inlined_call_operand.vmem [shape: bf16[32,512], index: 0, kind: input, shape index: {}]
  %s1 = inlined_call_operand.vmem [shape: bf16[512,64], index: 1, kind: input, shape index: {}]
  %s2 = inlined_call_operand.vmem [shape: f32[2,64], index: 2, kind: input, shape index: {}]
  %s3 = inlined_call_operand.vmem [shape: bf16[32,64], index: 3, kind: output, shape index: {}]
  %s4 = sld [smem:[#allocation0]]
  $region61: #{cnn_forward.4} parent=0
    _
  %s6 = ssub.s32 1, %s4
  %s7 = scalar_select 0, %s6, %s4
  loop: start=0, step=1, limit=4
  $region2: #{cnn_forward.4} parent=0 // loop_pre_header
    _
  $region3: #{cnn_forward.4} parent=0 // loop_header
    %s9 = sphi 0, %s13
    %p10 = scmp.ge.s32.totalorder %s9, 4
    %s16 = sphi 0, %s28
    %s17 = sphi 0, %s24
    %s18 = sphi 0, %s16
    %s19 = sphi 0, %s17
    %s20 = sphi 0, %s18
    %s21 = sphi 0, %s19
    %s31 = sphi 0, %s33
    %s34 = sphi 0, %s31
    %s35 = sphi 0, %s34
    %s51 = sphi 0, %s35
    %s55 = sphi 0, %s55
    %s57 = sphi 0, %s55
    %s58 = sphi 0, %s57
    %s72 = sphi 0, %s58
    %s76 = sphi 0, %s76
    %s78 = sphi 0, %s76
    %s79 = sphi 0, %s78
    %s93 = sphi 0, %s79
    %s101 = sphi 0, %s103
    %s104 = sphi 0, %s101
    %s105 = sphi 0, %s104
    %s121 = sphi 0, %s105
  $region4: #{cnn_forward.4} parent=0 // loop_header_branch
    %12 = sbr.rel (%p10) target = $region8
  $region5: #{cnn_forward.4} parent=0 // loop_body
    %s14 = ssub.s32 %s9, 1
    %s15 = ssub.s32 %s9, 2
    %s22 = sadd.s32 1, %s17
    %p23 = scmp.ge.s32.totalorder %s22, 1
    %s24 = scalar_select %p23, 0, %s22
    %s25 = sadd.s32 1, %s16
    %s26 = scalar_select %p23, %s25, %s16
    %p27 = scmp.ge.s32.totalorder %s26, 2
    %s28 = scalar_select %p27, 0, %s26
    %s29 = ssub.s32 %s17, %s24
    %p30 = scmp.eq.s32.totalorder %s29, 0
    %s32 = sadd.s32 %s31, 1
    %s33 = scalar_select %p30, %s31, %s32
    %p36 = pneg %p30
    %p37 = scmp.eq.s32.totalorder %s9, 1
    %p38 = por %p36, %p37
    %p39 = scmp.ne.s32.totalorder %s31, %s34
    %p40 = scmp.eq.s32.totalorder %s9, 0
    %p41 = por %p39, %p40
    %p42 = scmp.ne.s32.totalorder %s31, %s34
    %p43 = scmp.eq.s32.totalorder %s14, 1
    %p44 = por %p42, %p43
    %p45 = scmp.ne.s32.totalorder %s34, %s35
    %p46 = scmp.eq.s32.totalorder %s14, 0
    %p47 = por %p45, %p46
    %p48 = scmp.ne.s32.totalorder %s34, %s35
    %p49 = scmp.eq.s32.totalorder %s15, 1
    %p50 = por %p48, %p49
    %p52 = scmp.ne.s32.totalorder %s35, %s51
    %p53 = scmp.eq.s32.totalorder %s15, 0
    %p54 = por %p52, %p53
    %s56 = sadd.s32 %s55, 1
    %p59 = scmp.eq.s32.totalorder %s9, 1
    %p60 = scmp.ne.s32.totalorder %s55, %s57
    %p61 = scmp.eq.s32.totalorder %s9, 0
    %p62 = por %p60, %p61
    %p63 = scmp.ne.s32.totalorder %s55, %s57
    %p64 = scmp.eq.s32.totalorder %s14, 1
    %p65 = por %p63, %p64
    %p66 = scmp.ne.s32.totalorder %s57, %s58
    %p67 = scmp.eq.s32.totalorder %s14, 0
    %p68 = por %p66, %p67
    %p69 = scmp.ne.s32.totalorder %s57, %s58
    %p70 = scmp.eq.s32.totalorder %s15, 1
    %p71 = por %p69, %p70
    %p73 = scmp.ne.s32.totalorder %s58, %s72
    %p74 = scmp.eq.s32.totalorder %s15, 0
    %p75 = por %p73, %p74
    %s77 = sadd.s32 %s76, 1
    %p80 = scmp.eq.s32.totalorder %s9, 1
    %p81 = scmp.ne.s32.totalorder %s76, %s78
    %p82 = scmp.eq.s32.totalorder %s9, 0
    %p83 = por %p81, %p82
    %p84 = scmp.ne.s32.totalorder %s76, %s78
    %p85 = scmp.eq.s32.totalorder %s14, 1
    %p86 = por %p84, %p85
    %p87 = scmp.ne.s32.totalorder %s78, %s79
    %p88 = scmp.eq.s32.totalorder %s14, 0
    %p89 = por %p87, %p88
    %p90 = scmp.ne.s32.totalorder %s78, %s79
    %p91 = scmp.eq.s32.totalorder %s15, 1
    %p92 = por %p90, %p91
    %p94 = scmp.ne.s32.totalorder %s79, %s93
    %p95 = scmp.eq.s32.totalorder %s15, 0
    %p96 = por %p94, %p95
    %s97 = smul.u32 %s17, %s16
    %s98 = smul.u32 %s24, %s28
    %s99 = ssub.s32 %s97, %s98
    %p100 = scmp.eq.s32.totalorder %s99, 0
    %s102 = sadd.s32 %s101, 1
    %s103 = scalar_select %p100, %s101, %s102
    %p106 = pneg %p100
    %p107 = scmp.eq.s32.totalorder %s9, 1
    %p108 = por %p106, %p107
    %p109 = scmp.ne.s32.totalorder %s101, %s104
    %p110 = scmp.eq.s32.totalorder %s9, 0
    %p111 = por %p109, %p110
    %p112 = scmp.ne.s32.totalorder %s101, %s104
    %p113 = scmp.eq.s32.totalorder %s14, 1
    %p114 = por %p112, %p113
    %p115 = scmp.ne.s32.totalorder %s104, %s105
    %p116 = scmp.eq.s32.totalorder %s14, 0
    %p117 = por %p115, %p116
    %p118 = scmp.ne.s32.totalorder %s104, %s105
    %p119 = scmp.eq.s32.totalorder %s15, 1
    %p120 = por %p118, %p119
    %p122 = scmp.ne.s32.totalorder %s105, %s121
    %p123 = scmp.eq.s32.totalorder %s15, 0
    %p124 = por %p122, %p123
    %p125 = scmp.le.s32.totalorder 1, %s9
    %p126 = scmp.lt.s32.totalorder %s9, 3
    %p127 = pnand %p125, %p126
    %p128 = pneg %p127
    // Predicated region
    $region9: #{cnn_forward.4} parent=5 // pred_check
      _
    $region10: #{cnn_forward.4} parent=5 // pred_check_branch
      %130 = sbr.rel (%p127) target = $region12
    $region11: #{cnn_forward.4} parent=5 // pred_region
      %s131 = ssub.s32 %s9, 1
      // Predicated region
      $region13: #{cnn_forward.4} parent=11 // pred_check
        %p132 = pneg %p47
      $region14: #{cnn_forward.4} parent=11 // pred_check_branch
        %134 = sbr.rel (%p132) target = $region16
      $region15: #{cnn_forward.4} parent=11 // pred_region
        %s135 = smul.u32 4, %s19
        %p136 = scmp.lt.s32.totalorder %s135, 3
        %s137 = scalar_select %p136, %s135, 3
        %s138 = smul.addr %s137, 4
        %s139 = smul.addr %s138, 4
        %s140 = scalar_lea.vmem %s0, %s139
        %s141 = smul.u32 4, %s19
      $region16: #{cnn_forward.4} parent=11 // pred_fallthru
        _
      // Predicated region
      $region17: #{cnn_forward.4} parent=11 // pred_check
        %p142 = pneg %p68
      $region18: #{cnn_forward.4} parent=11 // pred_check_branch
        %144 = sbr.rel (%p142) target = $region20
      $region19: #{cnn_forward.4} parent=11 // pred_region
        _
      $region20: #{cnn_forward.4} parent=11 // pred_fallthru
        _
      // Predicated region
      $region21: #{cnn_forward.4} parent=11 // pred_check
        %p145 = pneg %p89
      $region22: #{cnn_forward.4} parent=11 // pred_check_branch
        %147 = sbr.rel (%p145) target = $region24
      $region23: #{cnn_forward.4} parent=11 // pred_region
        _
      $region24: #{cnn_forward.4} parent=11 // pred_fallthru
        _
    $region12: #{cnn_forward.4} parent=5 // pred_fallthru
      _
    %p148 = scmp.lt.s32.totalorder %s9, 2
    // Predicated region
    $region25: #{cnn_forward.4} parent=5 // pred_check
      %p149 = pneg %p148
    $region26: #{cnn_forward.4} parent=5 // pred_check_branch
      %151 = sbr.rel (%p149) target = $region28
    $region27: #{cnn_forward.4} parent=5 // pred_region
      _
    $region28: #{cnn_forward.4} parent=5 // pred_fallthru
      _
    %p152 = scmp.le.s32.totalorder 1, %s9
    %p153 = scmp.lt.s32.totalorder %s9, 3
    %p154 = pnand %p152, %p153
    %p155 = pneg %p154
    // Predicated region
    $region29: #{cnn_forward.4} parent=5 // pred_check
      _
    $region30: #{cnn_forward.4} parent=5 // pred_check_branch
      %157 = sbr.rel (%p154) target = $region32
    $region31: #{cnn_forward.4} parent=5 // pred_region
      %s158 = ssub.s32 %s9, 1
      %s159 = smul.u32 4, %s19
      %p160 = scmp.lt.s32.totalorder %s159, 3
      %s161 = scalar_select %p160, %s159, 3
      %s162 = smul.addr %s161, 4
      %s163 = smul.addr %s162, 4
      %s164 = scalar_lea.vmem %s0, %s163
      %p165 = pneg %p47
      %p166 = pneg %p44
      %p167 = pneg %p68
      %p168 = pneg %p65
      %p169 = pneg %p89
      %p170 = pneg %p86
      %p171 = pneg %p117
      %p172 = pneg %p114
      %s173 = smul.u32 %s19, %s18
      %s174 = smul.u32 4, %s173
      %p175 = scmp.lt.s32.totalorder %s174, 3
      %s176 = scalar_select %p175, %s174, 3
      %s177 = smul.addr %s176, 4
      %s178 = scalar_lea.vmem %s3, %s177
      %s179 = smul.u32 4, %s19
      %p180 = scmp.lt.s32.totalorder %s179, 3
      %s181 = scalar_select %p180, %s179, 3
      %s182 = smul.addr %s181, 4
      %s183 = smul.addr %s182, 4
      %s184 = scalar_lea.vmem %s0, %s183
      %s185 = smul.u32 4, %s19
      %s186 = smul.u32 %s19, %s18
      %s187 = smul.u32 4, %s186
      %p188 = scmp.lt.s32.totalorder %s187, 3
      %s189 = scalar_select %p188, %s187, 3
      %s190 = smul.addr %s189, 4
      %s191 = scalar_lea.vmem %s3, %s190
      %s192 = smul.u32 %s19, %s18
      %s193 = smul.u32 4, %s192
      %v195 = vld [vmem:[%s184] sm:$0xff]
      %v196 = vld [vmem:[%s184 + $0x8] sm:$0xff]
      %v197 = vld [vmem:[%s184 + $0x10] sm:$0xff]
      %v198 = vld [vmem:[%s184 + $0x18] sm:$0xff]
      %v199 = vld [vmem:[%s184 + $0x20] sm:$0xff]
      %v200 = vld [vmem:[%s184 + $0x28] sm:$0xff]
      %v201 = vld [vmem:[%s184 + $0x30] sm:$0xff]
      %v202 = vld [vmem:[%s184 + $0x38] sm:$0xff]
      %v203 = vld [vmem:[%s1] sm:$0xf]
      %v204 = vld [vmem:[%s1 + $0x4] sm:$0xf]
      %v205 = vld [vmem:[%s1 + $0x8] sm:$0xf]
      %v206 = vld [vmem:[%s1 + $0xc] sm:$0xf]
      %v207 = vld [vmem:[%s1 + $0x10] sm:$0xf]
      %v208 = vld [vmem:[%s1 + $0x14] sm:$0xf]
      %v209 = vld [vmem:[%s1 + $0x18] sm:$0xf]
      %v210 = vld [vmem:[%s1 + $0x1c] sm:$0xf]
      %v211 = vld [vmem:[%s1 + $0x20] sm:$0xf]
      %v212 = vld [vmem:[%s1 + $0x24] sm:$0xf]
      %v213 = vld [vmem:[%s1 + $0x28] sm:$0xf]
      %v214 = vld [vmem:[%s1 + $0x2c] sm:$0xf]
      %v215 = vld [vmem:[%s1 + $0x30] sm:$0xf]
      %v216 = vld [vmem:[%s1 + $0x34] sm:$0xf]
      %v217 = vld [vmem:[%s1 + $0x38] sm:$0xf]
      %v218 = vld [vmem:[%s1 + $0x3c] sm:$0xf]
      %v219 = vld [vmem:[%s1 + $0x40] sm:$0xf]
      %v220 = vld [vmem:[%s1 + $0x44] sm:$0xf]
      %v221 = vld [vmem:[%s1 + $0x48] sm:$0xf]
      %v222 = vld [vmem:[%s1 + $0x4c] sm:$0xf]
      %v223 = vld [vmem:[%s1 + $0x50] sm:$0xf]
      %v224 = vld [vmem:[%s1 + $0x54] sm:$0xf]
      %v225 = vld [vmem:[%s1 + $0x58] sm:$0xf]
      %v226 = vld [vmem:[%s1 + $0x5c] sm:$0xf]
      %v227 = vld [vmem:[%s1 + $0x60] sm:$0xf]
      %v228 = vld [vmem:[%s1 + $0x64] sm:$0xf]
      %v229 = vld [vmem:[%s1 + $0x68] sm:$0xf]
      %v230 = vld [vmem:[%s1 + $0x6c] sm:$0xf]
      %v231 = vld [vmem:[%s1 + $0x70] sm:$0xf]
      %v232 = vld [vmem:[%s1 + $0x74] sm:$0xf]
      %v233 = vld [vmem:[%s1 + $0x78] sm:$0xf]
      %v234 = vld [vmem:[%s1 + $0x7c] sm:$0xf]
      %v235 = vld [vmem:[%s1 + $0x80] sm:$0xf]
      %v236 = vld [vmem:[%s1 + $0x84] sm:$0xf]
      %v237 = vld [vmem:[%s1 + $0x88] sm:$0xf]
      %v238 = vld [vmem:[%s1 + $0x8c] sm:$0xf]
      %v239 = vld [vmem:[%s1 + $0x90] sm:$0xf]
      %v240 = vld [vmem:[%s1 + $0x94] sm:$0xf]
      %v241 = vld [vmem:[%s1 + $0x98] sm:$0xf]
      %v242 = vld [vmem:[%s1 + $0x9c] sm:$0xf]
      %v243 = vld [vmem:[%s1 + $0xa0] sm:$0xf]
      %v244 = vld [vmem:[%s1 + $0xa4] sm:$0xf]
      %v245 = vld [vmem:[%s1 + $0xa8] sm:$0xf]
      %v246 = vld [vmem:[%s1 + $0xac] sm:$0xf]
      %v247 = vld [vmem:[%s1 + $0xb0] sm:$0xf]
      %v248 = vld [vmem:[%s1 + $0xb4] sm:$0xf]
      %v249 = vld [vmem:[%s1 + $0xb8] sm:$0xf]
      %v250 = vld [vmem:[%s1 + $0xbc] sm:$0xf]
      %v251 = vld [vmem:[%s1 + $0xc0] sm:$0xf]
      %v252 = vld [vmem:[%s1 + $0xc4] sm:$0xf]
      %v253 = vld [vmem:[%s1 + $0xc8] sm:$0xf]
      %v254 = vld [vmem:[%s1 + $0xcc] sm:$0xf]
      %v255 = vld [vmem:[%s1 + $0xd0] sm:$0xf]
      %v256 = vld [vmem:[%s1 + $0xd4] sm:$0xf]
      %v257 = vld [vmem:[%s1 + $0xd8] sm:$0xf]
      %v258 = vld [vmem:[%s1 + $0xdc] sm:$0xf]
      %v259 = vld [vmem:[%s1 + $0xe0] sm:$0xf]
      %v260 = vld [vmem:[%s1 + $0xe4] sm:$0xf]
      %v261 = vld [vmem:[%s1 + $0xe8] sm:$0xf]
      %v262 = vld [vmem:[%s1 + $0xec] sm:$0xf]
      %v263 = vld [vmem:[%s1 + $0xf0] sm:$0xf]
      %v264 = vld [vmem:[%s1 + $0xf4] sm:$0xf]
      %v265 = vld [vmem:[%s1 + $0xf8] sm:$0xf]
      %v266 = vld [vmem:[%s1 + $0xfc] sm:$0xf]
      %v275 = vunpack.c.l.b16 %v195
      %v276 = vunpack.c.h.b16 %v195
      %v277 = vunpack.c.l.b16 %v196
      %v278 = vunpack.c.h.b16 %v196
      %v279 = vunpack.c.l.b16 %v197
      %v280 = vunpack.c.h.b16 %v197
      %v281 = vunpack.c.l.b16 %v198
      %v282 = vunpack.c.h.b16 %v198
      %v283 = vunpack.c.l.b16 %v199
      %v284 = vunpack.c.h.b16 %v199
      %v285 = vunpack.c.l.b16 %v200
      %v286 = vunpack.c.h.b16 %v200
      %v287 = vunpack.c.l.b16 %v201
      %v288 = vunpack.c.h.b16 %v201
      %v289 = vunpack.c.l.b16 %v202
      %v290 = vunpack.c.h.b16 %v202
      %v291 = vpack.c.b16 %v279, %v275
      %v292 = vpack.c.b16 %v280, %v276
      %v293 = vpack.c.b16 %v281, %v277
      %v294 = vpack.c.b16 %v282, %v278
      %v295 = vpack.c.b16 %v287, %v283
      %v296 = vpack.c.b16 %v288, %v284
      %v297 = vpack.c.b16 %v289, %v285
      %v298 = vpack.c.b16 %v290, %v286
      %v371 = vunpack.c.l.b16 %v203
      %v372 = vunpack.c.l.b16 %v204
      %v373 = vunpack.c.l.b16 %v205
      %v374 = vunpack.c.l.b16 %v206
      %v375 = vunpack.c.l.b16 %v207
      %v376 = vunpack.c.l.b16 %v208
      %v377 = vunpack.c.l.b16 %v209
      %v378 = vunpack.c.l.b16 %v210
      %v379 = vunpack.c.l.b16 %v211
      %v380 = vunpack.c.l.b16 %v212
      %v381 = vunpack.c.l.b16 %v213
      %v382 = vunpack.c.l.b16 %v214
      %v383 = vunpack.c.l.b16 %v215
      %v384 = vunpack.c.l.b16 %v216
      %v385 = vunpack.c.l.b16 %v217
      %v386 = vunpack.c.l.b16 %v218
      %v387 = vunpack.c.l.b16 %v219
      %v388 = vunpack.c.l.b16 %v220
      %v389 = vunpack.c.l.b16 %v221
      %v390 = vunpack.c.l.b16 %v222
      %v391 = vunpack.c.l.b16 %v223
      %v392 = vunpack.c.l.b16 %v224
      %v393 = vunpack.c.l.b16 %v225
      %v394 = vunpack.c.l.b16 %v226
      %v395 = vunpack.c.l.b16 %v227
      %v396 = vunpack.c.l.b16 %v228
      %v397 = vunpack.c.l.b16 %v229
      %v398 = vunpack.c.l.b16 %v230
      %v399 = vunpack.c.l.b16 %v231
      %v400 = vunpack.c.l.b16 %v232
      %v401 = vunpack.c.l.b16 %v233
      %v402 = vunpack.c.l.b16 %v234
      %v403 = vunpack.c.l.b16 %v235
      %v404 = vunpack.c.l.b16 %v236
      %v405 = vunpack.c.l.b16 %v237
      %v406 = vunpack.c.l.b16 %v238
      %v407 = vunpack.c.l.b16 %v239
      %v408 = vunpack.c.l.b16 %v240
      %v409 = vunpack.c.l.b16 %v241
      %v410 = vunpack.c.l.b16 %v242
      %v411 = vunpack.c.l.b16 %v243
      %v412 = vunpack.c.l.b16 %v244
      %v413 = vunpack.c.l.b16 %v245
      %v414 = vunpack.c.l.b16 %v246
      %v415 = vunpack.c.l.b16 %v247
      %v416 = vunpack.c.l.b16 %v248
      %v417 = vunpack.c.l.b16 %v249
      %v418 = vunpack.c.l.b16 %v250
      %v419 = vunpack.c.l.b16 %v251
      %v420 = vunpack.c.l.b16 %v252
      %v421 = vunpack.c.l.b16 %v253
      %v422 = vunpack.c.l.b16 %v254
      %v423 = vunpack.c.l.b16 %v255
      %v424 = vunpack.c.l.b16 %v256
      %v425 = vunpack.c.l.b16 %v257
      %v426 = vunpack.c.l.b16 %v258
      %v427 = vunpack.c.l.b16 %v259
      %v428 = vunpack.c.l.b16 %v260
      %v429 = vunpack.c.l.b16 %v261
      %v430 = vunpack.c.l.b16 %v262
      %v431 = vunpack.c.l.b16 %v263
      %v432 = vunpack.c.l.b16 %v264
      %v433 = vunpack.c.l.b16 %v265
      %v434 = vunpack.c.l.b16 %v266
      %v435 = vpack.c.b16 %v372, %v371
      %v436 = vpack.c.b16 %v374, %v373
      %v437 = vpack.c.b16 %v376, %v375
      %v438 = vpack.c.b16 %v378, %v377
      %v439 = vpack.c.b16 %v380, %v379
      %v440 = vpack.c.b16 %v382, %v381
      %v441 = vpack.c.b16 %v384, %v383
      %v442 = vpack.c.b16 %v386, %v385
      %v443 = vpack.c.b16 %v388, %v387
      %v444 = vpack.c.b16 %v390, %v389
      %v445 = vpack.c.b16 %v392, %v391
      %v446 = vpack.c.b16 %v394, %v393
      %v447 = vpack.c.b16 %v396, %v395
      %v448 = vpack.c.b16 %v398, %v397
      %v449 = vpack.c.b16 %v400, %v399
      %v450 = vpack.c.b16 %v402, %v401
      %v451 = vpack.c.b16 %v404, %v403
      %v452 = vpack.c.b16 %v406, %v405
      %v453 = vpack.c.b16 %v408, %v407
      %v454 = vpack.c.b16 %v410, %v409
      %v455 = vpack.c.b16 %v412, %v411
      %v456 = vpack.c.b16 %v414, %v413
      %v457 = vpack.c.b16 %v416, %v415
      %v458 = vpack.c.b16 %v418, %v417
      %v459 = vpack.c.b16 %v420, %v419
      %v460 = vpack.c.b16 %v422, %v421
      %v461 = vpack.c.b16 %v424, %v423
      %v462 = vpack.c.b16 %v426, %v425
      %v463 = vpack.c.b16 %v428, %v427
      %v464 = vpack.c.b16 %v430, %v429
      %v465 = vpack.c.b16 %v432, %v431
      %v466 = vpack.c.b16 %v434, %v433
      %499 = vmatprep.subr.bf16.mxu0 0
      %500 = vmatpush1.bf16.msra.mxu0 %v442
      %501 = vmatprep.subr.bf16.mxu0 0
      %502 = vmatpush1.bf16.msra.mxu0 %v441
      %503 = vmatprep.subr.bf16.mxu0 0
      %504 = vmatpush1.bf16.msra.mxu0 %v440
      %505 = vmatprep.subr.bf16.mxu0 0
      %506 = vmatpush1.bf16.msra.mxu0 %v439
      %507 = vmatprep.subr.bf16.mxu0 0
      %508 = vmatpush1.bf16.msra.mxu0 %v438
      %509 = vmatprep.subr.bf16.mxu0 0
      %510 = vmatpush1.bf16.msra.mxu0 %v437
      %511 = vmatprep.subr.bf16.mxu0 0
      %512 = vmatpush1.bf16.msra.mxu0 %v436
      %513 = vmatprep.subr.bf16.mxu0 0
      %514 = vmatpush1.bf16.msra.mxu0 %v435
      %515 = vmatprep.subr.bf16.mxu0 0
      %516 = vmatpush2.bf16.msra.mxu0 %v450
      %517 = vmatprep.subr.bf16.mxu0 0
      %518 = vmatpush2.bf16.msra.mxu0 %v449
      %519 = vmatprep.subr.bf16.mxu0 0
      %520 = vmatpush2.bf16.msra.mxu0 %v448
      %521 = vmatprep.subr.bf16.mxu0 0
      %522 = vmatpush2.bf16.msra.mxu0 %v447
      %523 = vmatprep.subr.bf16.mxu0 0
      %524 = vmatpush2.bf16.msra.mxu0 %v446
      %525 = vmatprep.subr.bf16.mxu0 0
      %526 = vmatpush2.bf16.msra.mxu0 %v445
      %527 = vmatprep.subr.bf16.mxu0 0
      %528 = vmatpush2.bf16.msra.mxu0 %v444
      %529 = vmatprep.subr.bf16.mxu0 0
      %530 = vmatpush2.bf16.msra.mxu0 %v443
      %531 = vmatprep.mubr.bf16.mxu0 %v292
      %532 = vmatmul.mubr.bf16.gmra.mxu0 %v291
      %v533 = vpop.f32.mrf.mxu0
      %v534 = vadd.f32 0.0, %v533
      %v535 = vpop.f32.mrf.mxu0
      %v536 = vpop.f32.mrf.mxu0
      %v537 = vadd.f32 0.0, %v536
      %v538 = vpop.f32.mrf.mxu0
      %539 = vmatprep.mubr.bf16.mxu0 %v296
      %540 = vmatmul.mubr.bf16.gmra.mxu0 %v295
      %v541 = vpop.f32.mrf.mxu0
      %v542 = vadd.f32 0.0, %v541
      %v543 = vpop.f32.mrf.mxu0
      %v544 = vpop.f32.mrf.mxu0
      %v545 = vadd.f32 0.0, %v544
      %v546 = vpop.f32.mrf.mxu0
      %547 = vdwg.mxu0
      %548 = vmatprep.subr.bf16.mxu0 0
      %549 = vmatpush1.bf16.msra.mxu0 %v458
      %550 = vmatprep.subr.bf16.mxu0 0
      %551 = vmatpush1.bf16.msra.mxu0 %v457
      %552 = vmatprep.subr.bf16.mxu0 0
      %553 = vmatpush1.bf16.msra.mxu0 %v456
      %554 = vmatprep.subr.bf16.mxu0 0
      %555 = vmatpush1.bf16.msra.mxu0 %v455
      %556 = vmatprep.subr.bf16.mxu0 0
      %557 = vmatpush1.bf16.msra.mxu0 %v454
      %558 = vmatprep.subr.bf16.mxu0 0
      %559 = vmatpush1.bf16.msra.mxu0 %v453
      %560 = vmatprep.subr.bf16.mxu0 0
      %561 = vmatpush1.bf16.msra.mxu0 %v452
      %562 = vmatprep.subr.bf16.mxu0 0
      %563 = vmatpush1.bf16.msra.mxu0 %v451
      %564 = vmatprep.subr.bf16.mxu0 0
      %565 = vmatpush2.bf16.msra.mxu0 %v466
      %566 = vmatprep.subr.bf16.mxu0 0
      %567 = vmatpush2.bf16.msra.mxu0 %v465
      %568 = vmatprep.subr.bf16.mxu0 0
      %569 = vmatpush2.bf16.msra.mxu0 %v464
      %570 = vmatprep.subr.bf16.mxu0 0
      %571 = vmatpush2.bf16.msra.mxu0 %v463
      %572 = vmatprep.subr.bf16.mxu0 0
      %573 = vmatpush2.bf16.msra.mxu0 %v462
      %574 = vmatprep.subr.bf16.mxu0 0
      %575 = vmatpush2.bf16.msra.mxu0 %v461
      %576 = vmatprep.subr.bf16.mxu0 0
      %577 = vmatpush2.bf16.msra.mxu0 %v460
      %578 = vmatprep.subr.bf16.mxu0 0
      %579 = vmatpush2.bf16.msra.mxu0 %v459
      %580 = vmatprep.mubr.bf16.mxu0 %v294
      %581 = vmatmul.mubr.bf16.gmra.mxu0 %v293
      %v582 = vpop.f32.mrf.mxu0
      %v583 = vadd.f32 %v534, %v582
      %v584 = vpop.f32.mrf.mxu0
      %v585 = vpop.f32.mrf.mxu0
      %v586 = vadd.f32 %v537, %v585
      %v587 = vpop.f32.mrf.mxu0
      %588 = vmatprep.mubr.bf16.mxu0 %v298
      %589 = vmatmul.mubr.bf16.gmra.mxu0 %v297
      %v590 = vpop.f32.mrf.mxu0
      %v591 = vadd.f32 %v542, %v590
      %v592 = vpop.f32.mrf.mxu0
      %v593 = vpop.f32.mrf.mxu0
      %v594 = vadd.f32 %v545, %v593
      %v595 = vpop.f32.mrf.mxu0
      %596 = vdwg.mxu0
      %p597 = scmp.eq.s32.totalorder %s18, 0
      %p598 = scmp.eq.s32.totalorder %s19, 0
      %p599 = pnand %p597, %p598
      %p600 = pneg %p599
      // Predicated region
      $region33: #{cnn_forward.4} parent=31 // pred_check
        _
      $region34: #{cnn_forward.4} parent=31 // pred_check_branch
        %602 = sbr.rel (%p599) target = $region36
      $region35: #{cnn_forward.4} parent=31 // pred_region
        %vm603 = vcmask 516096
        %604 = vst.msk [vmem:[#allocation2] sm:$0x1] %vm603, 0.0
        %605 = vst.msk [vmem:[#allocation3] sm:$0x1] %vm603, 0.0
      $region36: #{cnn_forward.4} parent=31 // pred_fallthru
        _
      // Predicated region
      $region37: #{cnn_forward.4} parent=31 // pred_check
        %p606 = pneg %p597
      $region38: #{cnn_forward.4} parent=31 // pred_check_branch
        %608 = sbr.rel (%p606) target = $region40
      $region39: #{cnn_forward.4} parent=31 // pred_region
        %v609 = vld [vmem:[#allocation2] sm:$0x1]
        %vm610 = vcmask 523264
        %v611 = vsel %vm610, %v583, 0.0
        %v612 = vsel %vm610, %v586, 0.0
        %v613 = vadd.f32 %v611, %v612
        %v614 = vsel %vm610, %v591, 0.0
        %v615 = vadd.f32 %v613, %v614
        %v616 = vsel %vm610, %v594, 0.0
        %v617 = vadd.f32 %v615, %v616
        %v618 = vrot.slane %v617, 4
        %v619 = vadd.f32 %v617, %v618
        %v620 = vrot.slane %v619, 2
        %v621 = vadd.f32 %v619, %v620
        %v622 = vrot.slane %v621, 1
        %v623 = vadd.f32 %v621, %v622
        %v624 = vadd.f32 %v609, %v623
        %vm625 = vcmask 516096
        %626 = vst.msk [vmem:[#allocation2] sm:$0x1] %vm625, %v624
        %v627 = vld [vmem:[#allocation3] sm:$0x1]
        %v628 = vmul.f32 %v583, %v583
        %v629 = vmul.f32 %v586, %v586
        %v630 = vmul.f32 %v591, %v591
        %v631 = vmul.f32 %v594, %v594
        %v632 = vsel %vm610, %v628, 0.0
        %v633 = vsel %vm610, %v629, 0.0
        %v634 = vadd.f32 %v632, %v633
        %v635 = vsel %vm610, %v630, 0.0
        %v636 = vadd.f32 %v634, %v635
        %v637 = vsel %vm610, %v631, 0.0
        %v638 = vadd.f32 %v636, %v637
        %v639 = vrot.slane %v638, 4
        %v640 = vadd.f32 %v638, %v639
        %v641 = vrot.slane %v640, 2
        %v642 = vadd.f32 %v640, %v641
        %v643 = vrot.slane %v642, 1
        %v644 = vadd.f32 %v642, %v643
        %v645 = vadd.f32 %v627, %v644
        %646 = vst.msk [vmem:[#allocation3] sm:$0x1] %vm625, %v645
      $region40: #{cnn_forward.4} parent=31 // pred_fallthru
        _
      %p647 = scmp.eq.s32.totalorder %s18, 1
      %p648 = pnand %p647, %p598
      %p649 = pneg %p648
      // Predicated region
      $region41: #{cnn_forward.4} parent=31 // pred_check
        _
      $region42: #{cnn_forward.4} parent=31 // pred_check_branch
        %651 = sbr.rel (%p648) target = $region44
      $region43: #{cnn_forward.4} parent=31 // pred_region
        %v652 = vld [vmem:[#allocation2] sm:$0x1]
        %v653 = vmul.f32 %v652, 0.055555556
        %v654 = vld [vmem:[#allocation3] sm:$0x1]
        %v655 = vmul.f32 %v654, 0.055555556
        %v656 = vmul.f32 %v653, %v653
        %v657 = vsub.f32 %v655, %v656
        %v658 = vmax.f32 %v657, 0.0
        %v659 = vld [vmem:[%s2] sm:$0x1]
        %v660 = vld [vmem:[%s2 + $0x1] sm:$0x1]
        %v661 = vadd.f32 %v658, 1e-05
        %v662 = vrsqrt.pop %v661
        %v663 = vmul.f32 %v659, %v662
        %vm664 = vcmask 516096
        %665 = vst.msk [vmem:[#allocation4] sm:$0x1] %vm664, %v663
        %v666 = vmul.f32 %v653, %v663
        %v667 = vsub.f32 %v660, %v666
        %668 = vst.msk [vmem:[#allocation5] sm:$0x1] %vm664, %v667
      $region44: #{cnn_forward.4} parent=31 // pred_fallthru
        _
      // Predicated region
      $region45: #{cnn_forward.4} parent=31 // pred_check
        %p669 = pneg %p647
      $region46: #{cnn_forward.4} parent=31 // pred_check_branch
        %671 = sbr.rel (%p669) target = $region48
      $region47: #{cnn_forward.4} parent=31 // pred_region
        %v672 = vld [vmem:[#allocation4] sm:$0x1]
        %v674 = vlaneseq
        %v675 = vshrl.u32 %v674, 7
        %v676 = vsub.s32 0, %v675
        %v677 = vrot.slane %v672, %v676
        %v679 = vmul.f32 %v583, %v677
        %v680 = vmul.f32 %v586, %v677
        %v681 = vmul.f32 %v591, %v677
        %v682 = vmul.f32 %v594, %v677
        %v683 = vld [vmem:[#allocation5] sm:$0x1]
        %v685 = vlaneseq
        %v686 = vshrl.u32 %v685, 7
        %v687 = vsub.s32 0, %v686
        %v688 = vrot.slane %v683, %v687
        %v690 = vadd.f32 %v679, %v688
        %v691 = vadd.f32 %v680, %v688
        %v692 = vadd.f32 %v681, %v688
        %v693 = vadd.f32 %v682, %v688
        %vm694 = vcmp.gt.f32.partialorder %v690, 0.0
        %vm695 = vcmp.gt.f32.partialorder %v691, 0.0
        %vm696 = vcmp.gt.f32.partialorder %v692, 0.0
        %vm697 = vcmp.gt.f32.partialorder %v693, 0.0
        %v698 = vmin.f32 %v690, 0.0
        %v699 = vmin.f32 %v691, 0.0
        %v700 = vmin.f32 %v692, 0.0
        %v701 = vmin.f32 %v693, 0.0
        %v702 = vmul.f32 %v698, 1.442695
        %v703 = vpow.pop %v702
        %v704 = vmul.f32 %v699, 1.442695
        %v705 = vpow.pop %v704
        %v706 = vmul.f32 %v700, 1.442695
        %v707 = vpow.pop %v706
        %v708 = vmul.f32 %v701, 1.442695
        %v709 = vpow.pop %v708
        %v710 = vsub.f32 %v703, 1.0
        %v711 = vsub.f32 %v705, 1.0
        %v712 = vsub.f32 %v707, 1.0
        %v713 = vsub.f32 %v709, 1.0
        %v714 = vsel %vm694, %v690, %v710
        %v715 = vsel %vm695, %v691, %v711
        %v716 = vsel %vm696, %v692, %v712
        %v717 = vsel %vm697, %v693, %v713
        %v718 = vpack.c.bf16 %v715, %v714
        %v719 = vpack.c.bf16 %v717, %v716
        %v722 = vunpack.c.l.b16 %v718
        %v723 = vunpack.c.h.b16 %v718
        %v724 = vunpack.c.l.b16 %v719
        %v725 = vunpack.c.h.b16 %v719
        %v726 = vpack.c.b16 %v722, %v722
        %v727 = vpack.c.b16 %v723, %v723
        %v728 = vpack.c.b16 %v724, %v724
        %v729 = vpack.c.b16 %v725, %v725
        %vm734 = vcmask 519168
        %735 = vst.msk [vmem:[%s191] sm:$0xf] %vm734, %v726
        %736 = vst.msk [vmem:[%s191 + $0x4] sm:$0xf] %vm734, %v727
        %737 = vst.msk [vmem:[%s191 + $0x8] sm:$0xf] %vm734, %v728
        %738 = vst.msk [vmem:[%s191 + $0xc] sm:$0xf] %vm734, %v729
      $region48: #{cnn_forward.4} parent=31 // pred_fallthru
        _
      %s739 = smul.u32 %s19, %s18
      %s740 = smul.u32 4, %s739
      %p741 = scmp.lt.s32.totalorder %s740, 3
      %s742 = scalar_select %p741, %s740, 3
      %s743 = smul.addr %s742, 4
      %s744 = scalar_lea.vmem %s3, %s743
      // Predicated region
      $region49: #{cnn_forward.4} parent=31 // pred_check
        %p745 = pneg %p114
      $region50: #{cnn_forward.4} parent=31 // pred_check_branch
        %747 = sbr.rel (%p745) target = $region52
      $region51: #{cnn_forward.4} parent=31 // pred_region
        %s748 = smul.u32 %s19, %s18
        %s749 = smul.u32 4, %s748
      $region52: #{cnn_forward.4} parent=31 // pred_fallthru
        _
    $region32: #{cnn_forward.4} parent=5 // pred_fallthru
      _
    %p750 = scmp.le.s32.totalorder 2, %s9
    // Predicated region
    $region53: #{cnn_forward.4} parent=5 // pred_check
      %p751 = pneg %p750
    $region54: #{cnn_forward.4} parent=5 // pred_check_branch
      %753 = sbr.rel (%p751) target = $region56
    $region55: #{cnn_forward.4} parent=5 // pred_region
      %s754 = ssub.s32 %s9, 2
      // Predicated region
      $region57: #{cnn_forward.4} parent=55 // pred_check
        %p755 = pneg %p120
      $region58: #{cnn_forward.4} parent=55 // pred_check_branch
        %757 = sbr.rel (%p755) target = $region60
      $region59: #{cnn_forward.4} parent=55 // pred_region
        %s758 = smul.u32 %s21, %s20
        %s759 = smul.u32 4, %s758
        %p760 = scmp.lt.s32.totalorder %s759, 3
        %s761 = scalar_select %p760, %s759, 3
        %s762 = smul.addr %s761, 4
        %s763 = scalar_lea.vmem %s3, %s762
      $region60: #{cnn_forward.4} parent=55 // pred_fallthru
        _
    $region56: #{cnn_forward.4} parent=5 // pred_fallthru
      _
  $region6: #{cnn_forward.4} parent=0 // loop_footer
    %s13 = sadd.s32 1, %s9
  $region7: #{cnn_forward.4} parent=0 // loop_footer_branch
    %8 = sbr.rel target = $region3
  $region8: #{cnn_forward.4} parent=0 // loop_exit
    _

// kernel: cnn_forward.5
$region0: #{cnn_forward.5}
  #allocation0 [shape = 'u32[]', space=smem, size = 0x4, offset = 0x4, fixed_abs, tag = 'smem constant byte address 0x4 - core index']
  #allocation1 [shape = 'u32[144,128]{1,0:T(1,128)}', space=vmem, size = 0x12000, scoped, tag = 'internal scratch']
  #allocation2 [shape = 'f32[1,64]{1,0:T(1,128)}', space=vmem, size = 0x200, scoped, tag = 'scratch operand']
  #allocation3 [shape = 'f32[1,64]{1,0:T(1,128)}', space=vmem, size = 0x200, scoped, tag = 'scratch operand']
  #allocation4 [shape = 'f32[1,64]{1,0:T(1,128)}', space=vmem, size = 0x200, scoped, tag = 'scratch operand']
  #allocation5 [shape = 'f32[1,64]{1,0:T(1,128)}', space=vmem, size = 0x200, scoped, tag = 'scratch operand']
  %s0 = inlined_call_operand.vmem [shape: bf16[32,576], index: 0, kind: input, shape index: {}]
  %s1 = inlined_call_operand.vmem [shape: bf16[576,64], index: 1, kind: input, shape index: {}]
  %s2 = inlined_call_operand.vmem [shape: f32[2,64], index: 2, kind: input, shape index: {}]
  %s3 = inlined_call_operand.vmem [shape: f32[32,64], index: 3, kind: output, shape index: {}]
  %s4 = sld [smem:[#allocation0]]
  $region61: #{cnn_forward.5} parent=0
    _
  %s6 = ssub.s32 1, %s4
  %s7 = scalar_select 0, %s6, %s4
  loop: start=0, step=1, limit=4
  $region2: #{cnn_forward.5} parent=0 // loop_pre_header
    _
  $region3: #{cnn_forward.5} parent=0 // loop_header
    %s9 = sphi 0, %s13
    %p10 = scmp.ge.s32.totalorder %s9, 4
    %s16 = sphi 0, %s28
    %s17 = sphi 0, %s24
    %s18 = sphi 0, %s16
    %s19 = sphi 0, %s17
    %s20 = sphi 0, %s18
    %s21 = sphi 0, %s19
    %s31 = sphi 0, %s33
    %s34 = sphi 0, %s31
    %s35 = sphi 0, %s34
    %s51 = sphi 0, %s35
    %s55 = sphi 0, %s55
    %s57 = sphi 0, %s55
    %s58 = sphi 0, %s57
    %s72 = sphi 0, %s58
    %s76 = sphi 0, %s76
    %s78 = sphi 0, %s76
    %s79 = sphi 0, %s78
    %s93 = sphi 0, %s79
    %s101 = sphi 0, %s103
    %s104 = sphi 0, %s101
    %s105 = sphi 0, %s104
    %s121 = sphi 0, %s105
  $region4: #{cnn_forward.5} parent=0 // loop_header_branch
    %12 = sbr.rel (%p10) target = $region8
  $region5: #{cnn_forward.5} parent=0 // loop_body
    %s14 = ssub.s32 %s9, 1
    %s15 = ssub.s32 %s9, 2
    %s22 = sadd.s32 1, %s17
    %p23 = scmp.ge.s32.totalorder %s22, 1
    %s24 = scalar_select %p23, 0, %s22
    %s25 = sadd.s32 1, %s16
    %s26 = scalar_select %p23, %s25, %s16
    %p27 = scmp.ge.s32.totalorder %s26, 2
    %s28 = scalar_select %p27, 0, %s26
    %s29 = ssub.s32 %s17, %s24
    %p30 = scmp.eq.s32.totalorder %s29, 0
    %s32 = sadd.s32 %s31, 1
    %s33 = scalar_select %p30, %s31, %s32
    %p36 = pneg %p30
    %p37 = scmp.eq.s32.totalorder %s9, 1
    %p38 = por %p36, %p37
    %p39 = scmp.ne.s32.totalorder %s31, %s34
    %p40 = scmp.eq.s32.totalorder %s9, 0
    %p41 = por %p39, %p40
    %p42 = scmp.ne.s32.totalorder %s31, %s34
    %p43 = scmp.eq.s32.totalorder %s14, 1
    %p44 = por %p42, %p43
    %p45 = scmp.ne.s32.totalorder %s34, %s35
    %p46 = scmp.eq.s32.totalorder %s14, 0
    %p47 = por %p45, %p46
    %p48 = scmp.ne.s32.totalorder %s34, %s35
    %p49 = scmp.eq.s32.totalorder %s15, 1
    %p50 = por %p48, %p49
    %p52 = scmp.ne.s32.totalorder %s35, %s51
    %p53 = scmp.eq.s32.totalorder %s15, 0
    %p54 = por %p52, %p53
    %s56 = sadd.s32 %s55, 1
    %p59 = scmp.eq.s32.totalorder %s9, 1
    %p60 = scmp.ne.s32.totalorder %s55, %s57
    %p61 = scmp.eq.s32.totalorder %s9, 0
    %p62 = por %p60, %p61
    %p63 = scmp.ne.s32.totalorder %s55, %s57
    %p64 = scmp.eq.s32.totalorder %s14, 1
    %p65 = por %p63, %p64
    %p66 = scmp.ne.s32.totalorder %s57, %s58
    %p67 = scmp.eq.s32.totalorder %s14, 0
    %p68 = por %p66, %p67
    %p69 = scmp.ne.s32.totalorder %s57, %s58
    %p70 = scmp.eq.s32.totalorder %s15, 1
    %p71 = por %p69, %p70
    %p73 = scmp.ne.s32.totalorder %s58, %s72
    %p74 = scmp.eq.s32.totalorder %s15, 0
    %p75 = por %p73, %p74
    %s77 = sadd.s32 %s76, 1
    %p80 = scmp.eq.s32.totalorder %s9, 1
    %p81 = scmp.ne.s32.totalorder %s76, %s78
    %p82 = scmp.eq.s32.totalorder %s9, 0
    %p83 = por %p81, %p82
    %p84 = scmp.ne.s32.totalorder %s76, %s78
    %p85 = scmp.eq.s32.totalorder %s14, 1
    %p86 = por %p84, %p85
    %p87 = scmp.ne.s32.totalorder %s78, %s79
    %p88 = scmp.eq.s32.totalorder %s14, 0
    %p89 = por %p87, %p88
    %p90 = scmp.ne.s32.totalorder %s78, %s79
    %p91 = scmp.eq.s32.totalorder %s15, 1
    %p92 = por %p90, %p91
    %p94 = scmp.ne.s32.totalorder %s79, %s93
    %p95 = scmp.eq.s32.totalorder %s15, 0
    %p96 = por %p94, %p95
    %s97 = smul.u32 %s17, %s16
    %s98 = smul.u32 %s24, %s28
    %s99 = ssub.s32 %s97, %s98
    %p100 = scmp.eq.s32.totalorder %s99, 0
    %s102 = sadd.s32 %s101, 1
    %s103 = scalar_select %p100, %s101, %s102
    %p106 = pneg %p100
    %p107 = scmp.eq.s32.totalorder %s9, 1
    %p108 = por %p106, %p107
    %p109 = scmp.ne.s32.totalorder %s101, %s104
    %p110 = scmp.eq.s32.totalorder %s9, 0
    %p111 = por %p109, %p110
    %p112 = scmp.ne.s32.totalorder %s101, %s104
    %p113 = scmp.eq.s32.totalorder %s14, 1
    %p114 = por %p112, %p113
    %p115 = scmp.ne.s32.totalorder %s104, %s105
    %p116 = scmp.eq.s32.totalorder %s14, 0
    %p117 = por %p115, %p116
    %p118 = scmp.ne.s32.totalorder %s104, %s105
    %p119 = scmp.eq.s32.totalorder %s15, 1
    %p120 = por %p118, %p119
    %p122 = scmp.ne.s32.totalorder %s105, %s121
    %p123 = scmp.eq.s32.totalorder %s15, 0
    %p124 = por %p122, %p123
    %p125 = scmp.le.s32.totalorder 1, %s9
    %p126 = scmp.lt.s32.totalorder %s9, 3
    %p127 = pnand %p125, %p126
    %p128 = pneg %p127
    // Predicated region
    $region9: #{cnn_forward.5} parent=5 // pred_check
      _
    $region10: #{cnn_forward.5} parent=5 // pred_check_branch
      %130 = sbr.rel (%p127) target = $region12
    $region11: #{cnn_forward.5} parent=5 // pred_region
      %s131 = ssub.s32 %s9, 1
      // Predicated region
      $region13: #{cnn_forward.5} parent=11 // pred_check
        %p132 = pneg %p47
      $region14: #{cnn_forward.5} parent=11 // pred_check_branch
        %134 = sbr.rel (%p132) target = $region16
      $region15: #{cnn_forward.5} parent=11 // pred_region
        %s135 = smul.u32 4, %s19
        %p136 = scmp.lt.s32.totalorder %s135, 3
        %s137 = scalar_select %p136, %s135, 3
        %s138 = smul.addr %s137, 5
        %s139 = smul.addr %s138, 4
        %s140 = scalar_lea.vmem %s0, %s139
        %s141 = smul.u32 4, %s19
      $region16: #{cnn_forward.5} parent=11 // pred_fallthru
        _
      // Predicated region
      $region17: #{cnn_forward.5} parent=11 // pred_check
        %p142 = pneg %p68
      $region18: #{cnn_forward.5} parent=11 // pred_check_branch
        %144 = sbr.rel (%p142) target = $region20
      $region19: #{cnn_forward.5} parent=11 // pred_region
        _
      $region20: #{cnn_forward.5} parent=11 // pred_fallthru
        _
      // Predicated region
      $region21: #{cnn_forward.5} parent=11 // pred_check
        %p145 = pneg %p89
      $region22: #{cnn_forward.5} parent=11 // pred_check_branch
        %147 = sbr.rel (%p145) target = $region24
      $region23: #{cnn_forward.5} parent=11 // pred_region
        _
      $region24: #{cnn_forward.5} parent=11 // pred_fallthru
        _
    $region12: #{cnn_forward.5} parent=5 // pred_fallthru
      _
    %p148 = scmp.lt.s32.totalorder %s9, 2
    // Predicated region
    $region25: #{cnn_forward.5} parent=5 // pred_check
      %p149 = pneg %p148
    $region26: #{cnn_forward.5} parent=5 // pred_check_branch
      %151 = sbr.rel (%p149) target = $region28
    $region27: #{cnn_forward.5} parent=5 // pred_region
      _
    $region28: #{cnn_forward.5} parent=5 // pred_fallthru
      _
    %p152 = scmp.le.s32.totalorder 1, %s9
    %p153 = scmp.lt.s32.totalorder %s9, 3
    %p154 = pnand %p152, %p153
    %p155 = pneg %p154
    // Predicated region
    $region29: #{cnn_forward.5} parent=5 // pred_check
      _
    $region30: #{cnn_forward.5} parent=5 // pred_check_branch
      %157 = sbr.rel (%p154) target = $region32
    $region31: #{cnn_forward.5} parent=5 // pred_region
      %s158 = ssub.s32 %s9, 1
      %s159 = smul.u32 4, %s19
      %p160 = scmp.lt.s32.totalorder %s159, 3
      %s161 = scalar_select %p160, %s159, 3
      %s162 = smul.addr %s161, 5
      %s163 = smul.addr %s162, 4
      %s164 = scalar_lea.vmem %s0, %s163
      %p165 = pneg %p47
      %p166 = pneg %p44
      %p167 = pneg %p68
      %p168 = pneg %p65
      %p169 = pneg %p89
      %p170 = pneg %p86
      %p171 = pneg %p117
      %p172 = pneg %p114
      %s173 = smul.u32 %s19, %s18
      %s174 = smul.u32 4, %s173
      %p175 = scmp.lt.s32.totalorder %s174, 3
      %s176 = scalar_select %p175, %s174, 3
      %s177 = smul.addr %s176, 8
      %s178 = scalar_lea.vmem %s3, %s177
      %s179 = smul.u32 4, %s19
      %p180 = scmp.lt.s32.totalorder %s179, 3
      %s181 = scalar_select %p180, %s179, 3
      %s182 = smul.addr %s181, 5
      %s183 = smul.addr %s182, 4
      %s184 = scalar_lea.vmem %s0, %s183
      %s185 = smul.u32 4, %s19
      %s186 = smul.u32 %s19, %s18
      %s187 = smul.u32 4, %s186
      %p188 = scmp.lt.s32.totalorder %s187, 3
      %s189 = scalar_select %p188, %s187, 3
      %s190 = smul.addr %s189, 8
      %s191 = scalar_lea.vmem %s3, %s190
      %s192 = smul.u32 %s19, %s18
      %s193 = smul.u32 4, %s192
      %v195 = vld [vmem:[%s184] sm:$0xff]
      %v196 = vld [vmem:[%s184 + $0x8] sm:$0xff]
      %v197 = vld [vmem:[%s184 + $0x10] sm:$0xf]
      %v198 = vld [vmem:[%s184 + $0x14] sm:$0xff]
      %v199 = vld [vmem:[%s184 + $0x1c] sm:$0xff]
      %v200 = vld [vmem:[%s184 + $0x24] sm:$0xf]
      %v201 = vld [vmem:[%s184 + $0x28] sm:$0xff]
      %v202 = vld [vmem:[%s184 + $0x30] sm:$0xff]
      %v203 = vld [vmem:[%s184 + $0x38] sm:$0xf]
      %v204 = vld [vmem:[%s184 + $0x3c] sm:$0xff]
      %v205 = vld [vmem:[%s184 + $0x44] sm:$0xff]
      %v206 = vld [vmem:[%s184 + $0x4c] sm:$0xf]
      %v207 = vld [vmem:[%s1] sm:$0xf]
      %v208 = vld [vmem:[%s1 + $0x4] sm:$0xf]
      %v209 = vld [vmem:[%s1 + $0x8] sm:$0xf]
      %v210 = vld [vmem:[%s1 + $0xc] sm:$0xf]
      %v211 = vld [vmem:[%s1 + $0x10] sm:$0xf]
      %v212 = vld [vmem:[%s1 + $0x14] sm:$0xf]
      %v213 = vld [vmem:[%s1 + $0x18] sm:$0xf]
      %v214 = vld [vmem:[%s1 + $0x1c] sm:$0xf]
      %v215 = vld [vmem:[%s1 + $0x20] sm:$0xf]
      %v216 = vld [vmem:[%s1 + $0x24] sm:$0xf]
      %v217 = vld [vmem:[%s1 + $0x28] sm:$0xf]
      %v218 = vld [vmem:[%s1 + $0x2c] sm:$0xf]
      %v219 = vld [vmem:[%s1 + $0x30] sm:$0xf]
      %v220 = vld [vmem:[%s1 + $0x34] sm:$0xf]
      %v221 = vld [vmem:[%s1 + $0x38] sm:$0xf]
      %v222 = vld [vmem:[%s1 + $0x3c] sm:$0xf]
      %v223 = vld [vmem:[%s1 + $0x40] sm:$0xf]
      %v224 = vld [vmem:[%s1 + $0x44] sm:$0xf]
      %v225 = vld [vmem:[%s1 + $0x48] sm:$0xf]
      %v226 = vld [vmem:[%s1 + $0x4c] sm:$0xf]
      %v227 = vld [vmem:[%s1 + $0x50] sm:$0xf]
      %v228 = vld [vmem:[%s1 + $0x54] sm:$0xf]
      %v229 = vld [vmem:[%s1 + $0x58] sm:$0xf]
      %v230 = vld [vmem:[%s1 + $0x5c] sm:$0xf]
      %v231 = vld [vmem:[%s1 + $0x60] sm:$0xf]
      %v232 = vld [vmem:[%s1 + $0x64] sm:$0xf]
      %v233 = vld [vmem:[%s1 + $0x68] sm:$0xf]
      %v234 = vld [vmem:[%s1 + $0x6c] sm:$0xf]
      %v235 = vld [vmem:[%s1 + $0x70] sm:$0xf]
      %v236 = vld [vmem:[%s1 + $0x74] sm:$0xf]
      %v237 = vld [vmem:[%s1 + $0x78] sm:$0xf]
      %v238 = vld [vmem:[%s1 + $0x7c] sm:$0xf]
      %v239 = vld [vmem:[%s1 + $0x80] sm:$0xf]
      %v240 = vld [vmem:[%s1 + $0x84] sm:$0xf]
      %v241 = vld [vmem:[%s1 + $0x88] sm:$0xf]
      %v242 = vld [vmem:[%s1 + $0x8c] sm:$0xf]
      %v243 = vld [vmem:[%s1 + $0x90] sm:$0xf]
      %v244 = vld [vmem:[%s1 + $0x94] sm:$0xf]
      %v245 = vld [vmem:[%s1 + $0x98] sm:$0xf]
      %v246 = vld [vmem:[%s1 + $0x9c] sm:$0xf]
      %v247 = vld [vmem:[%s1 + $0xa0] sm:$0xf]
      %v248 = vld [vmem:[%s1 + $0xa4] sm:$0xf]
      %v249 = vld [vmem:[%s1 + $0xa8] sm:$0xf]
      %v250 = vld [vmem:[%s1 + $0xac] sm:$0xf]
      %v251 = vld [vmem:[%s1 + $0xb0] sm:$0xf]
      %v252 = vld [vmem:[%s1 + $0xb4] sm:$0xf]
      %v253 = vld [vmem:[%s1 + $0xb8] sm:$0xf]
      %v254 = vld [vmem:[%s1 + $0xbc] sm:$0xf]
      %v255 = vld [vmem:[%s1 + $0xc0] sm:$0xf]
      %v256 = vld [vmem:[%s1 + $0xc4] sm:$0xf]
      %v257 = vld [vmem:[%s1 + $0xc8] sm:$0xf]
      %v258 = vld [vmem:[%s1 + $0xcc] sm:$0xf]
      %v259 = vld [vmem:[%s1 + $0xd0] sm:$0xf]
      %v260 = vld [vmem:[%s1 + $0xd4] sm:$0xf]
      %v261 = vld [vmem:[%s1 + $0xd8] sm:$0xf]
      %v262 = vld [vmem:[%s1 + $0xdc] sm:$0xf]
      %v263 = vld [vmem:[%s1 + $0xe0] sm:$0xf]
      %v264 = vld [vmem:[%s1 + $0xe4] sm:$0xf]
      %v265 = vld [vmem:[%s1 + $0xe8] sm:$0xf]
      %v266 = vld [vmem:[%s1 + $0xec] sm:$0xf]
      %v267 = vld [vmem:[%s1 + $0xf0] sm:$0xf]
      %v268 = vld [vmem:[%s1 + $0xf4] sm:$0xf]
      %v269 = vld [vmem:[%s1 + $0xf8] sm:$0xf]
      %v270 = vld [vmem:[%s1 + $0xfc] sm:$0xf]
      %v271 = vld [vmem:[%s1 + $0x100] sm:$0xf]
      %v272 = vld [vmem:[%s1 + $0x104] sm:$0xf]
      %v273 = vld [vmem:[%s1 + $0x108] sm:$0xf]
      %v274 = vld [vmem:[%s1 + $0x10c] sm:$0xf]
      %v275 = vld [vmem:[%s1 + $0x110] sm:$0xf]
      %v276 = vld [vmem:[%s1 + $0x114] sm:$0xf]
      %v277 = vld [vmem:[%s1 + $0x118] sm:$0xf]
      %v278 = vld [vmem:[%s1 + $0x11c] sm:$0xf]
      %v291 = vunpack.c.l.b16 %v195
      %v292 = vunpack.c.h.b16 %v195
      %v293 = vunpack.c.l.b16 %v196
      %v294 = vunpack.c.h.b16 %v196
      %v295 = vunpack.c.l.b16 %v197
      %v296 = vunpack.c.l.b16 %v198
      %v297 = vunpack.c.h.b16 %v198
      %v298 = vunpack.c.l.b16 %v199
      %v299 = vunpack.c.h.b16 %v199
      %v300 = vunpack.c.l.b16 %v200
      %v301 = vunpack.c.l.b16 %v201
      %v302 = vunpack.c.h.b16 %v201
      %v303 = vunpack.c.l.b16 %v202
      %v304 = vunpack.c.h.b16 %v202
      %v305 = vunpack.c.l.b16 %v203
      %v306 = vunpack.c.l.b16 %v204
      %v307 = vunpack.c.h.b16 %v204
      %v308 = vunpack.c.l.b16 %v205
      %v309 = vunpack.c.h.b16 %v205
      %v310 = vunpack.c.l.b16 %v206
      %v311 = vpack.c.b16 %v296, %v291
      %v312 = vpack.c.b16 %v297, %v292
      %v313 = vpack.c.b16 %v298, %v293
      %v314 = vpack.c.b16 %v299, %v294
      %v315 = vpack.c.b16 %v300, %v295
      %v316 = vpack.c.b16 %v306, %v301
      %v317 = vpack.c.b16 %v307, %v302
      %v318 = vpack.c.b16 %v308, %v303
      %v319 = vpack.c.b16 %v309, %v304
      %v320 = vpack.c.b16 %v310, %v305
      %v401 = vunpack.c.l.b16 %v207
      %v402 = vunpack.c.l.b16 %v208
      %v403 = vunpack.c.l.b16 %v209
      %v404 = vunpack.c.l.b16 %v210
      %v405 = vunpack.c.l.b16 %v211
      %v406 = vunpack.c.l.b16 %v212
      %v407 = vunpack.c.l.b16 %v213
      %v408 = vunpack.c.l.b16 %v214
      %v409 = vunpack.c.l.b16 %v215
      %v410 = vunpack.c.l.b16 %v216
      %v411 = vunpack.c.l.b16 %v217
      %v412 = vunpack.c.l.b16 %v218
      %v413 = vunpack.c.l.b16 %v219
      %v414 = vunpack.c.l.b16 %v220
      %v415 = vunpack.c.l.b16 %v221
      %v416 = vunpack.c.l.b16 %v222
      %v417 = vunpack.c.l.b16 %v223
      %v418 = vunpack.c.l.b16 %v224
      %v419 = vunpack.c.l.b16 %v225
      %v420 = vunpack.c.l.b16 %v226
      %v421 = vunpack.c.l.b16 %v227
      %v422 = vunpack.c.l.b16 %v228
      %v423 = vunpack.c.l.b16 %v229
      %v424 = vunpack.c.l.b16 %v230
      %v425 = vunpack.c.l.b16 %v231
      %v426 = vunpack.c.l.b16 %v232
      %v427 = vunpack.c.l.b16 %v233
      %v428 = vunpack.c.l.b16 %v234
      %v429 = vunpack.c.l.b16 %v235
      %v430 = vunpack.c.l.b16 %v236
      %v431 = vunpack.c.l.b16 %v237
      %v432 = vunpack.c.l.b16 %v238
      %v433 = vunpack.c.l.b16 %v239
      %v434 = vunpack.c.l.b16 %v240
      %v435 = vunpack.c.l.b16 %v241
      %v436 = vunpack.c.l.b16 %v242
      %v437 = vunpack.c.l.b16 %v243
      %v438 = vunpack.c.l.b16 %v244
      %v439 = vunpack.c.l.b16 %v245
      %v440 = vunpack.c.l.b16 %v246
      %v441 = vunpack.c.l.b16 %v247
      %v442 = vunpack.c.l.b16 %v248
      %v443 = vunpack.c.l.b16 %v249
      %v444 = vunpack.c.l.b16 %v250
      %v445 = vunpack.c.l.b16 %v251
      %v446 = vunpack.c.l.b16 %v252
      %v447 = vunpack.c.l.b16 %v253
      %v448 = vunpack.c.l.b16 %v254
      %v449 = vunpack.c.l.b16 %v255
      %v450 = vunpack.c.l.b16 %v256
      %v451 = vunpack.c.l.b16 %v257
      %v452 = vunpack.c.l.b16 %v258
      %v453 = vunpack.c.l.b16 %v259
      %v454 = vunpack.c.l.b16 %v260
      %v455 = vunpack.c.l.b16 %v261
      %v456 = vunpack.c.l.b16 %v262
      %v457 = vunpack.c.l.b16 %v263
      %v458 = vunpack.c.l.b16 %v264
      %v459 = vunpack.c.l.b16 %v265
      %v460 = vunpack.c.l.b16 %v266
      %v461 = vunpack.c.l.b16 %v267
      %v462 = vunpack.c.l.b16 %v268
      %v463 = vunpack.c.l.b16 %v269
      %v464 = vunpack.c.l.b16 %v270
      %v465 = vunpack.c.l.b16 %v271
      %v466 = vunpack.c.l.b16 %v272
      %v467 = vunpack.c.l.b16 %v273
      %v468 = vunpack.c.l.b16 %v274
      %v469 = vunpack.c.l.b16 %v275
      %v470 = vunpack.c.l.b16 %v276
      %v471 = vunpack.c.l.b16 %v277
      %v472 = vunpack.c.l.b16 %v278
      %v473 = vpack.c.b16 %v402, %v401
      %v474 = vpack.c.b16 %v404, %v403
      %v475 = vpack.c.b16 %v406, %v405
      %v476 = vpack.c.b16 %v408, %v407
      %v477 = vpack.c.b16 %v410, %v409
      %v478 = vpack.c.b16 %v412, %v411
      %v479 = vpack.c.b16 %v414, %v413
      %v480 = vpack.c.b16 %v416, %v415
      %v481 = vpack.c.b16 %v418, %v417
      %v482 = vpack.c.b16 %v420, %v419
      %v483 = vpack.c.b16 %v422, %v421
      %v484 = vpack.c.b16 %v424, %v423
      %v485 = vpack.c.b16 %v426, %v425
      %v486 = vpack.c.b16 %v428, %v427
      %v487 = vpack.c.b16 %v430, %v429
      %v488 = vpack.c.b16 %v432, %v431
      %v489 = vpack.c.b16 %v434, %v433
      %v490 = vpack.c.b16 %v436, %v435
      %v491 = vpack.c.b16 %v438, %v437
      %v492 = vpack.c.b16 %v440, %v439
      %v493 = vpack.c.b16 %v442, %v441
      %v494 = vpack.c.b16 %v444, %v443
      %v495 = vpack.c.b16 %v446, %v445
      %v496 = vpack.c.b16 %v448, %v447
      %v497 = vpack.c.b16 %v450, %v449
      %v498 = vpack.c.b16 %v452, %v451
      %v499 = vpack.c.b16 %v454, %v453
      %v500 = vpack.c.b16 %v456, %v455
      %v501 = vpack.c.b16 %v458, %v457
      %v502 = vpack.c.b16 %v460, %v459
      %v503 = vpack.c.b16 %v462, %v461
      %v504 = vpack.c.b16 %v464, %v463
      %v505 = vpack.c.b16 %v466, %v465
      %v506 = vpack.c.b16 %v468, %v467
      %v507 = vpack.c.b16 %v470, %v469
      %v508 = vpack.c.b16 %v472, %v471
      %vm545 = vcmask 523264
      %v547 = vsel %vm545, %v315, 0
      %v550 = vsel %vm545, %v320, 0
      %552 = vmatprep.subr.bf16.mxu0 0
      %553 = vmatpush1.bf16.msra.mxu0 %v480
      %554 = vmatprep.subr.bf16.mxu0 0
      %555 = vmatpush1.bf16.msra.mxu0 %v479
      %556 = vmatprep.subr.bf16.mxu0 0
      %557 = vmatpush1.bf16.msra.mxu0 %v478
      %558 = vmatprep.subr.bf16.mxu0 0
      %559 = vmatpush1.bf16.msra.mxu0 %v477
      %560 = vmatprep.subr.bf16.mxu0 0
      %561 = vmatpush1.bf16.msra.mxu0 %v476
      %562 = vmatprep.subr.bf16.mxu0 0
      %563 = vmatpush1.bf16.msra.mxu0 %v475
      %564 = vmatprep.subr.bf16.mxu0 0
      %565 = vmatpush1.bf16.msra.mxu0 %v474
      %566 = vmatprep.subr.bf16.mxu0 0
      %567 = vmatpush1.bf16.msra.mxu0 %v473
      %568 = vmatprep.subr.bf16.mxu0 0
      %569 = vmatpush2.bf16.msra.mxu0 %v488
      %570 = vmatprep.subr.bf16.mxu0 0
      %571 = vmatpush2.bf16.msra.mxu0 %v487
      %572 = vmatprep.subr.bf16.mxu0 0
      %573 = vmatpush2.bf16.msra.mxu0 %v486
      %574 = vmatprep.subr.bf16.mxu0 0
      %575 = vmatpush2.bf16.msra.mxu0 %v485
      %576 = vmatprep.subr.bf16.mxu0 0
      %577 = vmatpush2.bf16.msra.mxu0 %v484
      %578 = vmatprep.subr.bf16.mxu0 0
      %579 = vmatpush2.bf16.msra.mxu0 %v483
      %580 = vmatprep.subr.bf16.mxu0 0
      %581 = vmatpush2.bf16.msra.mxu0 %v482
      %582 = vmatprep.subr.bf16.mxu0 0
      %583 = vmatpush2.bf16.msra.mxu0 %v481
      %584 = vmatprep.mubr.bf16.mxu0 %v312
      %585 = vmatmul.mubr.bf16.gmra.mxu0 %v311
      %v586 = vpop.f32.mrf.mxu0
      %v587 = vadd.f32 0.0, %v586
      %v588 = vpop.f32.mrf.mxu0
      %v589 = vpop.f32.mrf.mxu0
      %v590 = vadd.f32 0.0, %v589
      %v591 = vpop.f32.mrf.mxu0
      %592 = vmatprep.mubr.bf16.mxu0 %v317
      %593 = vmatmul.mubr.bf16.gmra.mxu0 %v316
      %v594 = vpop.f32.mrf.mxu0
      %v595 = vadd.f32 0.0, %v594
      %v596 = vpop.f32.mrf.mxu0
      %v597 = vpop.f32.mrf.mxu0
      %v598 = vadd.f32 0.0, %v597
      %v599 = vpop.f32.mrf.mxu0
      %600 = vdwg.mxu0
      %601 = vmatprep.subr.bf16.mxu0 0
      %602 = vmatpush1.bf16.msra.mxu0 %v496
      %603 = vmatprep.subr.bf16.mxu0 0
      %604 = vmatpush1.bf16.msra.mxu0 %v495
      %605 = vmatprep.subr.bf16.mxu0 0
      %606 = vmatpush1.bf16.msra.mxu0 %v494
      %607 = vmatprep.subr.bf16.mxu0 0
      %608 = vmatpush1.bf16.msra.mxu0 %v493
      %609 = vmatprep.subr.bf16.mxu0 0
      %610 = vmatpush1.bf16.msra.mxu0 %v492
      %611 = vmatprep.subr.bf16.mxu0 0
      %612 = vmatpush1.bf16.msra.mxu0 %v491
      %613 = vmatprep.subr.bf16.mxu0 0
      %614 = vmatpush1.bf16.msra.mxu0 %v490
      %615 = vmatprep.subr.bf16.mxu0 0
      %616 = vmatpush1.bf16.msra.mxu0 %v489
      %617 = vmatprep.subr.bf16.mxu0 0
      %618 = vmatpush2.bf16.msra.mxu0 %v504
      %619 = vmatprep.subr.bf16.mxu0 0
      %620 = vmatpush2.bf16.msra.mxu0 %v503
      %621 = vmatprep.subr.bf16.mxu0 0
      %622 = vmatpush2.bf16.msra.mxu0 %v502
      %623 = vmatprep.subr.bf16.mxu0 0
      %624 = vmatpush2.bf16.msra.mxu0 %v501
      %625 = vmatprep.subr.bf16.mxu0 0
      %626 = vmatpush2.bf16.msra.mxu0 %v500
      %627 = vmatprep.subr.bf16.mxu0 0
      %628 = vmatpush2.bf16.msra.mxu0 %v499
      %629 = vmatprep.subr.bf16.mxu0 0
      %630 = vmatpush2.bf16.msra.mxu0 %v498
      %631 = vmatprep.subr.bf16.mxu0 0
      %632 = vmatpush2.bf16.msra.mxu0 %v497
      %633 = vmatprep.mubr.bf16.mxu0 %v314
      %634 = vmatmul.mubr.bf16.gmra.mxu0 %v313
      %v635 = vpop.f32.mrf.mxu0
      %v636 = vadd.f32 %v587, %v635
      %v637 = vpop.f32.mrf.mxu0
      %v638 = vpop.f32.mrf.mxu0
      %v639 = vadd.f32 %v590, %v638
      %v640 = vpop.f32.mrf.mxu0
      %641 = vmatprep.mubr.bf16.mxu0 %v319
      %642 = vmatmul.mubr.bf16.gmra.mxu0 %v318
      %v643 = vpop.f32.mrf.mxu0
      %v644 = vadd.f32 %v595, %v643
      %v645 = vpop.f32.mrf.mxu0
      %v646 = vpop.f32.mrf.mxu0
      %v647 = vadd.f32 %v598, %v646
      %v648 = vpop.f32.mrf.mxu0
      %649 = vdwg.mxu0
      %650 = vmatprep.subr.bf16.mxu0 0
      %651 = vmatpush1.bf16.msra.mxu0 0
      %652 = vmatprep.subr.bf16.mxu0 0
      %653 = vmatpush1.bf16.msra.mxu0 0
      %654 = vmatprep.subr.bf16.mxu0 0
      %655 = vmatpush1.bf16.msra.mxu0 0
      %656 = vmatprep.subr.bf16.mxu0 0
      %657 = vmatpush1.bf16.msra.mxu0 0
      %658 = vmatprep.subr.bf16.mxu0 0
      %659 = vmatpush1.bf16.msra.mxu0 %v508
      %660 = vmatprep.subr.bf16.mxu0 0
      %661 = vmatpush1.bf16.msra.mxu0 %v507
      %662 = vmatprep.subr.bf16.mxu0 0
      %663 = vmatpush1.bf16.msra.mxu0 %v506
      %664 = vmatprep.subr.bf16.mxu0 0
      %665 = vmatpush1.bf16.msra.mxu0 %v505
      %666 = vmatprep.subr.bf16.mxu0 0
      %667 = vmatpush2.bf16.msra.mxu0 0
      %668 = vmatprep.subr.bf16.mxu0 0
      %669 = vmatpush2.bf16.msra.mxu0 0
      %670 = vmatprep.subr.bf16.mxu0 0
      %671 = vmatpush2.bf16.msra.mxu0 0
      %672 = vmatprep.subr.bf16.mxu0 0
      %673 = vmatpush2.bf16.msra.mxu0 0
      %674 = vmatprep.subr.bf16.mxu0 0
      %675 = vmatpush2.bf16.msra.mxu0 0
      %676 = vmatprep.subr.bf16.mxu0 0
      %677 = vmatpush2.bf16.msra.mxu0 0
      %678 = vmatprep.subr.bf16.mxu0 0
      %679 = vmatpush2.bf16.msra.mxu0 0
      %680 = vmatprep.subr.bf16.mxu0 0
      %681 = vmatpush2.bf16.msra.mxu0 0
      %682 = vmatprep.mubr.bf16.mxu0 0
      %683 = vmatmul.mubr.bf16.gmra.mxu0 %v547
      %v684 = vpop.f32.mrf.mxu0
      %v685 = vadd.f32 %v636, %v684
      %v686 = vpop.f32.mrf.mxu0
      %v687 = vpop.f32.mrf.mxu0
      %v688 = vadd.f32 %v639, %v687
      %v689 = vpop.f32.mrf.mxu0
      %690 = vmatprep.mubr.bf16.mxu0 0
      %691 = vmatmul.mubr.bf16.gmra.mxu0 %v550
      %v692 = vpop.f32.mrf.mxu0
      %v693 = vadd.f32 %v644, %v692
      %v694 = vpop.f32.mrf.mxu0
      %v695 = vpop.f32.mrf.mxu0
      %v696 = vadd.f32 %v647, %v695
      %v697 = vpop.f32.mrf.mxu0
      %698 = vdwg.mxu0
      %p699 = scmp.eq.s32.totalorder %s18, 0
      %p700 = scmp.eq.s32.totalorder %s19, 0
      %p701 = pnand %p699, %p700
      %p702 = pneg %p701
      // Predicated region
      $region33: #{cnn_forward.5} parent=31 // pred_check
        _
      $region34: #{cnn_forward.5} parent=31 // pred_check_branch
        %704 = sbr.rel (%p701) target = $region36
      $region35: #{cnn_forward.5} parent=31 // pred_region
        %vm705 = vcmask 516096
        %706 = vst.msk [vmem:[#allocation2] sm:$0x1] %vm705, 0.0
        %707 = vst.msk [vmem:[#allocation3] sm:$0x1] %vm705, 0.0
      $region36: #{cnn_forward.5} parent=31 // pred_fallthru
        _
      // Predicated region
      $region37: #{cnn_forward.5} parent=31 // pred_check
        %p708 = pneg %p699
      $region38: #{cnn_forward.5} parent=31 // pred_check_branch
        %710 = sbr.rel (%p708) target = $region40
      $region39: #{cnn_forward.5} parent=31 // pred_region
        %v711 = vld [vmem:[#allocation2] sm:$0x1]
        %v712 = vsel %vm545, %v685, 0.0
        %v713 = vsel %vm545, %v688, 0.0
        %v714 = vadd.f32 %v712, %v713
        %v715 = vsel %vm545, %v693, 0.0
        %v716 = vadd.f32 %v714, %v715
        %v717 = vsel %vm545, %v696, 0.0
        %v718 = vadd.f32 %v716, %v717
        %v719 = vrot.slane %v718, 4
        %v720 = vadd.f32 %v718, %v719
        %v721 = vrot.slane %v720, 2
        %v722 = vadd.f32 %v720, %v721
        %v723 = vrot.slane %v722, 1
        %v724 = vadd.f32 %v722, %v723
        %v725 = vadd.f32 %v711, %v724
        %vm726 = vcmask 516096
        %727 = vst.msk [vmem:[#allocation2] sm:$0x1] %vm726, %v725
        %v728 = vld [vmem:[#allocation3] sm:$0x1]
        %v729 = vmul.f32 %v685, %v685
        %v730 = vmul.f32 %v688, %v688
        %v731 = vmul.f32 %v693, %v693
        %v732 = vmul.f32 %v696, %v696
        %v733 = vsel %vm545, %v729, 0.0
        %v734 = vsel %vm545, %v730, 0.0
        %v735 = vadd.f32 %v733, %v734
        %v736 = vsel %vm545, %v731, 0.0
        %v737 = vadd.f32 %v735, %v736
        %v738 = vsel %vm545, %v732, 0.0
        %v739 = vadd.f32 %v737, %v738
        %v740 = vrot.slane %v739, 4
        %v741 = vadd.f32 %v739, %v740
        %v742 = vrot.slane %v741, 2
        %v743 = vadd.f32 %v741, %v742
        %v744 = vrot.slane %v743, 1
        %v745 = vadd.f32 %v743, %v744
        %v746 = vadd.f32 %v728, %v745
        %747 = vst.msk [vmem:[#allocation3] sm:$0x1] %vm726, %v746
      $region40: #{cnn_forward.5} parent=31 // pred_fallthru
        _
      %p748 = scmp.eq.s32.totalorder %s18, 1
      %p749 = pnand %p748, %p700
      %p750 = pneg %p749
      // Predicated region
      $region41: #{cnn_forward.5} parent=31 // pred_check
        _
      $region42: #{cnn_forward.5} parent=31 // pred_check_branch
        %752 = sbr.rel (%p749) target = $region44
      $region43: #{cnn_forward.5} parent=31 // pred_region
        %v753 = vld [vmem:[#allocation2] sm:$0x1]
        %v754 = vmul.f32 %v753, 0.055555556
        %v755 = vld [vmem:[#allocation3] sm:$0x1]
        %v756 = vmul.f32 %v755, 0.055555556
        %v757 = vmul.f32 %v754, %v754
        %v758 = vsub.f32 %v756, %v757
        %v759 = vmax.f32 %v758, 0.0
        %v760 = vld [vmem:[%s2] sm:$0x1]
        %v761 = vld [vmem:[%s2 + $0x1] sm:$0x1]
        %v762 = vadd.f32 %v759, 1e-05
        %v763 = vrsqrt.pop %v762
        %v764 = vmul.f32 %v760, %v763
        %vm765 = vcmask 516096
        %766 = vst.msk [vmem:[#allocation4] sm:$0x1] %vm765, %v764
        %v767 = vmul.f32 %v754, %v764
        %v768 = vsub.f32 %v761, %v767
        %769 = vst.msk [vmem:[#allocation5] sm:$0x1] %vm765, %v768
      $region44: #{cnn_forward.5} parent=31 // pred_fallthru
        _
      // Predicated region
      $region45: #{cnn_forward.5} parent=31 // pred_check
        %p770 = pneg %p748
      $region46: #{cnn_forward.5} parent=31 // pred_check_branch
        %772 = sbr.rel (%p770) target = $region48
      $region47: #{cnn_forward.5} parent=31 // pred_region
        %v773 = vld [vmem:[#allocation4] sm:$0x1]
        %v775 = vlaneseq
        %v776 = vshrl.u32 %v775, 7
        %v777 = vsub.s32 0, %v776
        %v778 = vrot.slane %v773, %v777
        %v780 = vmul.f32 %v685, %v778
        %v781 = vmul.f32 %v688, %v778
        %v782 = vmul.f32 %v693, %v778
        %v783 = vmul.f32 %v696, %v778
        %v784 = vld [vmem:[#allocation5] sm:$0x1]
        %v786 = vlaneseq
        %v787 = vshrl.u32 %v786, 7
        %v788 = vsub.s32 0, %v787
        %v789 = vrot.slane %v784, %v788
        %v791 = vadd.f32 %v780, %v789
        %v792 = vadd.f32 %v781, %v789
        %v793 = vadd.f32 %v782, %v789
        %v794 = vadd.f32 %v783, %v789
        %vm795 = vcmp.gt.f32.partialorder %v791, 0.0
        %vm796 = vcmp.gt.f32.partialorder %v792, 0.0
        %vm797 = vcmp.gt.f32.partialorder %v793, 0.0
        %vm798 = vcmp.gt.f32.partialorder %v794, 0.0
        %v799 = vmin.f32 %v791, 0.0
        %v800 = vmin.f32 %v792, 0.0
        %v801 = vmin.f32 %v793, 0.0
        %v802 = vmin.f32 %v794, 0.0
        %v803 = vmul.f32 %v799, 1.442695
        %v804 = vpow.pop %v803
        %v805 = vmul.f32 %v800, 1.442695
        %v806 = vpow.pop %v805
        %v807 = vmul.f32 %v801, 1.442695
        %v808 = vpow.pop %v807
        %v809 = vmul.f32 %v802, 1.442695
        %v810 = vpow.pop %v809
        %v811 = vsub.f32 %v804, 1.0
        %v812 = vsub.f32 %v806, 1.0
        %v813 = vsub.f32 %v808, 1.0
        %v814 = vsub.f32 %v810, 1.0
        %v815 = vsel %vm795, %v791, %v811
        %v816 = vsel %vm796, %v792, %v812
        %v817 = vsel %vm797, %v793, %v813
        %v818 = vsel %vm798, %v794, %v814
        %819 = vst.msk [vmem:[%s191] sm:$0xff] %vm545, %v815
        %820 = vst.msk [vmem:[%s191 + $0x8] sm:$0xff] %vm545, %v816
        %821 = vst.msk [vmem:[%s191 + $0x10] sm:$0xff] %vm545, %v817
        %822 = vst.msk [vmem:[%s191 + $0x18] sm:$0xff] %vm545, %v818
      $region48: #{cnn_forward.5} parent=31 // pred_fallthru
        _
      %s823 = smul.u32 %s19, %s18
      %s824 = smul.u32 4, %s823
      %p825 = scmp.lt.s32.totalorder %s824, 3
      %s826 = scalar_select %p825, %s824, 3
      %s827 = smul.addr %s826, 8
      %s828 = scalar_lea.vmem %s3, %s827
      // Predicated region
      $region49: #{cnn_forward.5} parent=31 // pred_check
        %p829 = pneg %p114
      $region50: #{cnn_forward.5} parent=31 // pred_check_branch
        %831 = sbr.rel (%p829) target = $region52
      $region51: #{cnn_forward.5} parent=31 // pred_region
        %s832 = smul.u32 %s19, %s18
        %s833 = smul.u32 4, %s832
      $region52: #{cnn_forward.5} parent=31 // pred_fallthru
        _
    $region32: #{cnn_forward.5} parent=5 // pred_fallthru
      _
    %p834 = scmp.le.s32.totalorder 2, %s9
    // Predicated region
    $region53: #{cnn_forward.5} parent=5 // pred_check
      %p835 = pneg %p834
    $region54: #{cnn_forward.5} parent=5 // pred_check_branch
      %837 = sbr.rel (%p835) target = $region56
    $region55: #{cnn_forward.5} parent=5 // pred_region
      %s838 = ssub.s32 %s9, 2
      // Predicated region
      $region57: #{cnn_forward.5} parent=55 // pred_check
        %p839 = pneg %p120
      $region58: #{cnn_forward.5} parent=55 // pred_check_branch
        %841 = sbr.rel (%p839) target = $region60
      $region59: #{cnn_forward.5} parent=55 // pred_region
        %s842 = smul.u32 %s21, %s20
        %s843 = smul.u32 4, %s842
        %p844 = scmp.lt.s32.totalorder %s843, 3
        %s845 = scalar_select %p844, %s843, 3
        %s846 = smul.addr %s845, 8
        %s847 = scalar_lea.vmem %s3, %s846
      $region60: #{cnn_forward.5} parent=55 // pred_fallthru
        _
    $region56: #{cnn_forward.5} parent=5 // pred_fallthru
      _
  $region6: #{cnn_forward.5} parent=0 // loop_footer
    %s13 = sadd.s32 1, %s9
  $region7: #{cnn_forward.5} parent=0 // loop_footer_branch
    %8 = sbr.rel target = $region3
  $region8: #{cnn_forward.5} parent=0 // loop_exit
    _

</llo_original>
